<compile_context>
chip_gen: v7x
topology: tpu7x:2x2x1
jax: 0.10.0
libtpu: 0.0.40
codegen_flags: <defaults>
</compile_context>

<pallas_src>
import jax
import jax.numpy as jnp
from jax.experimental import pallas as pl
from jax.experimental.pallas import tpu as pltpu


def _attention_kernel(xpad_ref, a0_ref, b0_ref, as_ref, bs_ref, w1_ref, b1_ref,
                      o_ref, pad1_ref):
    # xpad_ref : (B, H+4,  WC)  input, vertically zero-padded by 2 rows, lane-dense
    # a0_ref   : (5, WC, WC)    banded matrices for depthwise 5x5 (horiz. pad folded in)
    # as_ref   : (7, WC, WC)    banded matrices for depthwise 7x7, dilation 3
    # w1_ref   : (WC, WC)       block-diagonal 1x1-conv weights = kron(I_W, w1)
    # b*_ref   : (1, WC)        biases tiled along lanes
    # o_ref    : (B, H, WC)
    # pad1_ref : VMEM (B, H+18, WC) vertically padded conv_spatial input (scratch)
    B, H, WC = o_ref.shape
    f32 = jnp.float32

    # Zero only the vertical halo rows of the conv_spatial scratch.  Full-lane-width
    # (128-lane) rows -> unmasked stores; interior rows are overwritten below.
    pad1_ref[:, 0:9, :] = jnp.zeros((B, 9, WC), f32)
    pad1_ref[:, 9 + H:18 + H, :] = jnp.zeros((B, 9, WC), f32)

    b0b = jnp.broadcast_to(b0_ref[...], (H, WC))       # hoisted: broadcasts are not CSE'd
    bsb = jnp.broadcast_to(bs_ref[...], (H, WC))
    b1b = jnp.broadcast_to(b1_ref[...], (B * H, WC))

    # ---------------- conv0: depthwise 5x5 as 5 banded MXU matmuls ----------------
    acc0 = [b0b for _ in range(B)]
    for i in range(5):                                  # kh taps
        a_i = a0_ref[i]                                 # (WC, WC), loaded once per tap
        for b in range(B):
            acc0[b] = acc0[b] + jnp.dot(xpad_ref[b, i:i + H, :], a_i,
                                        preferred_element_type=f32)
    for b in range(B):
        pad1_ref[b, 9:9 + H, :] = acc0[b]

    # -------- conv_spatial: depthwise 7x7, dilation 3, as 7 banded MXU matmuls --------
    acc1 = [bsb for _ in range(B)]
    for i in range(7):
        a_i = as_ref[i]
        for b in range(B):
            acc1[b] = acc1[b] + jnp.dot(pad1_ref[b, 3 * i:3 * i + H, :], a_i,
                                        preferred_element_type=f32)

    # -------- conv1: 1x1 pointwise conv as one block-diagonal matmul (M = B*H) --------
    acc_all = jnp.concatenate(acc1, axis=0)             # (B*H, WC), sublane-aligned concat
    attn_all = jnp.dot(acc_all, w1_ref[...],
                       preferred_element_type=f32) + b1b

    # -------- gating: u * attn --------
    for b in range(B):
        attn_b = attn_all[b * H:(b + 1) * H, :]
        o_ref[b] = (xpad_ref[b, 2:2 + H, :] * attn_b).astype(o_ref.dtype)


def _banded_matrices(dw_khkwc, W, dilation, pad):
    """Depthwise weights (kh, kw, C) -> per-kh-tap banded (W*C, W*C) matrices.

    A_i[(w + j*dilation - pad)*C + c, w*C + c] = dw[i, j, c]  (zero-padding columns
    outside [0, W) simply drop out of the band)."""
    kh, kw, C = dw_khkwc.shape
    f32 = jnp.float32
    mats = []
    for i in range(kh):
        A = jnp.zeros((W * C, W * C), f32)
        for j in range(kw):
            off = j * dilation - pad
            shift = jnp.eye(W, k=-off, dtype=f32)        # shift[w+off, w] = 1
            A = A + jnp.kron(shift, jnp.diag(dw_khkwc[i, j]))
        mats.append(A)
    return jnp.stack(mats)                               # (kh, W*C, W*C)


def attention_module(x_nchw, w0_t, b0, ws_t, bs, w1_t, b1):
    """x_nchw: (B, C, H, W) float32, weights in PyTorch layouts."""
    B, C, H, W = x_nchw.shape
    WC = W * C
    f32 = jnp.float32

    # NCHW -> NHWC -> lane-dense (B, H, W*C) flattening, then vertical pad for conv0.
    x = jnp.transpose(x_nchw, (0, 2, 3, 1)).reshape(B, H, WC).astype(f32)
    xpad = jnp.pad(x, ((0, 0), (2, 2), (0, 0)))          # (B, H+4, WC)

    # Depthwise weights: torch (C,1,kh,kw) -> (kh,kw,C) -> banded (kh, WC, WC) slabs.
    w0_k = jnp.transpose(w0_t[:, 0, :, :], (1, 2, 0)).astype(f32)   # (5,5,C)
    ws_k = jnp.transpose(ws_t[:, 0, :, :], (1, 2, 0)).astype(f32)   # (7,7,C)
    a0 = _banded_matrices(w0_k, W, dilation=1, pad=2)               # (5, WC, WC)
    a_s = _banded_matrices(ws_k, W, dilation=3, pad=9)              # (7, WC, WC)

    b0_flat = jnp.tile(b0.astype(f32), W).reshape(1, WC)
    bs_flat = jnp.tile(bs.astype(f32), W).reshape(1, WC)
    b1_flat = jnp.tile(b1.astype(f32), W).reshape(1, WC)

    # 1x1 conv as block-diagonal (WC, WC) matrix.
    w1_k = jnp.transpose(w1_t[:, :, 0, 0], (1, 0)).astype(f32)      # (C_in, C_out)
    w1_bd = jnp.kron(jnp.eye(W, dtype=f32), w1_k)                   # (WC, WC)

    out_flat = pl.pallas_call(
        _attention_kernel,
        out_shape=jax.ShapeDtypeStruct((B, H, WC), f32),
        grid_spec=pltpu.PrefetchScalarGridSpec(
            num_scalar_prefetch=0,
            grid=(1,),                                   # whole batch in one step
            in_specs=[
                pl.BlockSpec((B, H + 4, WC), lambda g: (0, 0, 0)),
                pl.BlockSpec((5, WC, WC), lambda g: (0, 0, 0)),
                pl.BlockSpec((1, WC), lambda g: (0, 0)),
                pl.BlockSpec((7, WC, WC), lambda g: (0, 0, 0)),
                pl.BlockSpec((1, WC), lambda g: (0, 0)),
                pl.BlockSpec((WC, WC), lambda g: (0, 0)),
                pl.BlockSpec((1, WC), lambda g: (0, 0)),
            ],
            out_specs=pl.BlockSpec((B, H, WC), lambda g: (0, 0, 0)),
            scratch_shapes=[
                pltpu.VMEM((B, H + 18, WC), f32),        # conv_spatial vertical-pad scratch
            ],
        ),
        compiler_params=pltpu.CompilerParams(
            dimension_semantics=("arbitrary",)),
    )(xpad, a0, b0_flat, a_s, bs_flat, w1_bd, b1_flat)

    # (B, H, W*C) -> NHWC -> NCHW
    return jnp.transpose(out_flat.reshape(B, H, W, C), (0, 3, 1, 2))


def _reference(x, w0_t, b0, ws_t, bs, w1_t, b1):
    """Pure-JAX reference matching PyTorch semantics (NCHW / OIHW)."""
    dn = ("NCHW", "OIHW", "NCHW")
    hp = jax.lax.Precision.HIGHEST
    C = x.shape[1]
    a = jax.lax.conv_general_dilated(x, w0_t, (1, 1), ((2, 2), (2, 2)),
                                     feature_group_count=C, dimension_numbers=dn,
                                     precision=hp)
    a = a + b0.reshape(1, C, 1, 1)
    a = jax.lax.conv_general_dilated(a, ws_t, (1, 1), ((9, 9), (9, 9)),
                                     rhs_dilation=(3, 3),
                                     feature_group_count=C, dimension_numbers=dn,
                                     precision=hp)
    a = a + bs.reshape(1, C, 1, 1)
    a = jax.lax.conv_general_dilated(a, w1_t, (1, 1), ((0, 0), (0, 0)),
                                     dimension_numbers=dn, precision=hp)
    a = a + b1.reshape(1, C, 1, 1)
    return x * a


if __name__ == "__main__":
    B, C, H, W = 2, 8, 16, 16

    key = jax.random.PRNGKey(0)
    ks = jax.random.split(key, 7)
    x = jax.random.normal(ks[0], (B, C, H, W), jnp.float32)

    # Deterministic parameter init (PyTorch layouts).
    w0_t = jax.random.normal(ks[1], (C, 1, 5, 5), jnp.float32) * 0.1   # conv0.weight
    b0   = jax.random.normal(ks[2], (C,), jnp.float32) * 0.1           # conv0.bias
    ws_t = jax.random.normal(ks[3], (C, 1, 7, 7), jnp.float32) * 0.1   # conv_spatial.weight
    bs   = jax.random.normal(ks[4], (C,), jnp.float32) * 0.1           # conv_spatial.bias
    w1_t = jax.random.normal(ks[5], (C, C, 1, 1), jnp.float32) * 0.1   # conv1.weight
    b1   = jax.random.normal(ks[6], (C,), jnp.float32) * 0.1           # conv1.bias

    out = attention_module(x, w0_t, b0, ws_t, bs, w1_t, b1)
    out = jax.block_until_ready(out)

    ref = jax.block_until_ready(_reference(x, w0_t, b0, ws_t, bs, w1_t, b1))
    assert out.shape == (B, C, H, W)
    assert jnp.allclose(out, ref, atol=1e-3, rtol=1e-3), (
        f"max abs diff {jnp.max(jnp.abs(out - ref))}")

    print("KERNEL_OK")
</pallas_src>

<mosaic_0001>
module attributes {stable_mosaic.version = 11 : i64} {
  func.func @_attention_kernel(%arg0: i32, %arg1: memref<2x20x128xf32, #tpu.memory_space<vmem>>, %arg2: memref<5x128x128xf32, #tpu.memory_space<vmem>>, %arg3: memref<1x128xf32, #tpu.memory_space<vmem>>, %arg4: memref<7x128x128xf32, #tpu.memory_space<vmem>>, %arg5: memref<1x128xf32, #tpu.memory_space<vmem>>, %arg6: memref<128x128xf32, #tpu.memory_space<vmem>>, %arg7: memref<1x128xf32, #tpu.memory_space<vmem>>, %arg8: memref<2x16x128xf32, #tpu.memory_space<vmem>>, %arg9: memref<2x34x128xf32, #tpu.memory_space<vmem>>) attributes {dimension_semantics = [#tpu.dimension_semantics<arbitrary>], iteration_bounds = array<i64: 1>, scalar_prefetch = 0 : i64, scratch_operands = 1 : i64, tpu.core_type = #tpu.core_type<tc>, window_params = [{pipeline_mode = #tpu.pipeline_mode<synchronous>, transform_indices = @transform_0, window_bounds = array<i64: 2, 20, 128>}, {pipeline_mode = #tpu.pipeline_mode<synchronous>, transform_indices = @transform_1, window_bounds = array<i64: 5, 128, 128>}, {pipeline_mode = #tpu.pipeline_mode<synchronous>, transform_indices = @transform_2, window_bounds = array<i64: 1, 128>}, {pipeline_mode = #tpu.pipeline_mode<synchronous>, transform_indices = @transform_3, window_bounds = array<i64: 7, 128, 128>}, {pipeline_mode = #tpu.pipeline_mode<synchronous>, transform_indices = @transform_4, window_bounds = array<i64: 1, 128>}, {pipeline_mode = #tpu.pipeline_mode<synchronous>, transform_indices = @transform_5, window_bounds = array<i64: 128, 128>}, {pipeline_mode = #tpu.pipeline_mode<synchronous>, transform_indices = @transform_6, window_bounds = array<i64: 1, 128>}, {pipeline_mode = #tpu.pipeline_mode<synchronous>, transform_indices = @transform_7, window_bounds = array<i64: 2, 16, 128>}]} {
    %cst = arith.constant 0.000000e+00 : f32
    %0 = vector.broadcast %cst : f32 to vector<2x9x128xf32>
    %c0 = arith.constant 0 : index
    %c0_0 = arith.constant 0 : index
    %c0_1 = arith.constant 0 : index
    %1 = vector.load %arg9[%c0, %c0_0, %c0_1] : memref<2x34x128xf32, #tpu.memory_space<vmem>>, vector<2x9x128xf32>
    tpu.vector_store %arg9[%c0, %c0_0, %c0_1], %0 {strides = array<i32>} : memref<2x34x128xf32, #tpu.memory_space<vmem>>, vector<2x9x128xf32>,
    %cst_2 = arith.constant 0.000000e+00 : f32
    %2 = vector.broadcast %cst_2 : f32 to vector<2x9x128xf32>
    %c0_3 = arith.constant 0 : index
    %c25 = arith.constant 25 : index
    %c0_4 = arith.constant 0 : index
    %3 = vector.load %arg9[%c0_3, %c25, %c0_4] : memref<2x34x128xf32, #tpu.memory_space<vmem>>, vector<2x9x128xf32>
    tpu.vector_store %arg9[%c0_3, %c25, %c0_4], %2 {strides = array<i32>} : memref<2x34x128xf32, #tpu.memory_space<vmem>>, vector<2x9x128xf32>,
    %c0_5 = arith.constant 0 : index
    %c0_6 = arith.constant 0 : index
    %4 = vector.load %arg3[%c0_5, %c0_6] : memref<1x128xf32, #tpu.memory_space<vmem>>, vector<1x128xf32>
    %5 = vector.shape_cast %4 : vector<1x128xf32> to vector<1x128xf32>
    %6 = vector.broadcast %5 : vector<1x128xf32> to vector<16x128xf32>
    %c0_7 = arith.constant 0 : index
    %c0_8 = arith.constant 0 : index
    %7 = vector.load %arg5[%c0_7, %c0_8] : memref<1x128xf32, #tpu.memory_space<vmem>>, vector<1x128xf32>
    %8 = vector.shape_cast %7 : vector<1x128xf32> to vector<1x128xf32>
    %9 = vector.broadcast %8 : vector<1x128xf32> to vector<16x128xf32>
    %c0_9 = arith.constant 0 : index
    %c0_10 = arith.constant 0 : index
    %10 = vector.load %arg7[%c0_9, %c0_10] : memref<1x128xf32, #tpu.memory_space<vmem>>, vector<1x128xf32>
    %11 = vector.shape_cast %10 : vector<1x128xf32> to vector<1x128xf32>
    %12 = vector.broadcast %11 : vector<1x128xf32> to vector<32x128xf32>
    %c0_11 = arith.constant 0 : index
    %c0_12 = arith.constant 0 : index
    %c0_13 = arith.constant 0 : index
    %13 = vector.load %arg2[%c0_11, %c0_12, %c0_13] : memref<5x128x128xf32, #tpu.memory_space<vmem>>, vector<1x128x128xf32>
    %14 = vector.shape_cast %13 : vector<1x128x128xf32> to vector<128x128xf32>
    %c0_14 = arith.constant 0 : index
    %c0_15 = arith.constant 0 : index
    %c0_16 = arith.constant 0 : index
    %15 = vector.load %arg1[%c0_14, %c0_15, %c0_16] : memref<2x20x128xf32, #tpu.memory_space<vmem>>, vector<1x16x128xf32>
    %16 = vector.shape_cast %15 : vector<1x16x128xf32> to vector<16x128xf32>
    %cst_17 = arith.constant dense<0.000000e+00> : vector<16x128xf32>
    %17 = tpu.matmul %16, %14, %cst_17 {dimension_numbers = #tpu.dot_dimension_numbers<[1], [0], [0], [1], [0, 0, 1, 1], [], []>} : vector<16x128xf32>, vector<128x128xf32>, vector<16x128xf32> -> vector<16x128xf32>
    %18 = arith.addf %6, %17 : vector<16x128xf32>
    %c1 = arith.constant 1 : index
    %c0_18 = arith.constant 0 : index
    %c0_19 = arith.constant 0 : index
    %19 = vector.load %arg1[%c1, %c0_18, %c0_19] : memref<2x20x128xf32, #tpu.memory_space<vmem>>, vector<1x16x128xf32>
    %20 = vector.shape_cast %19 : vector<1x16x128xf32> to vector<16x128xf32>
    %cst_20 = arith.constant dense<0.000000e+00> : vector<16x128xf32>
    %21 = tpu.matmul %20, %14, %cst_20 {dimension_numbers = #tpu.dot_dimension_numbers<[1], [0], [0], [1], [0, 0, 1, 1], [], []>} : vector<16x128xf32>, vector<128x128xf32>, vector<16x128xf32> -> vector<16x128xf32>
    %22 = arith.addf %6, %21 : vector<16x128xf32>
    %c1_21 = arith.constant 1 : index
    %c0_22 = arith.constant 0 : index
    %c0_23 = arith.constant 0 : index
    %23 = vector.load %arg2[%c1_21, %c0_22, %c0_23] : memref<5x128x128xf32, #tpu.memory_space<vmem>>, vector<1x128x128xf32>
    %24 = vector.shape_cast %23 : vector<1x128x128xf32> to vector<128x128xf32>
    %c0_24 = arith.constant 0 : index
    %c1_25 = arith.constant 1 : index
    %c0_26 = arith.constant 0 : index
    %25 = vector.load %arg1[%c0_24, %c1_25, %c0_26] : memref<2x20x128xf32, #tpu.memory_space<vmem>>, vector<1x16x128xf32>
    %26 = vector.shape_cast %25 : vector<1x16x128xf32> to vector<16x128xf32>
    %cst_27 = arith.constant dense<0.000000e+00> : vector<16x128xf32>
    %27 = tpu.matmul %26, %24, %cst_27 {dimension_numbers = #tpu.dot_dimension_numbers<[1], [0], [0], [1], [0, 0, 1, 1], [], []>} : vector<16x128xf32>, vector<128x128xf32>, vector<16x128xf32> -> vector<16x128xf32>
    %28 = arith.addf %18, %27 : vector<16x128xf32>
    %c1_28 = arith.constant 1 : index
    %c1_29 = arith.constant 1 : index
    %c0_30 = arith.constant 0 : index
    %29 = vector.load %arg1[%c1_28, %c1_29, %c0_30] : memref<2x20x128xf32, #tpu.memory_space<vmem>>, vector<1x16x128xf32>
    %30 = vector.shape_cast %29 : vector<1x16x128xf32> to vector<16x128xf32>
    %cst_31 = arith.constant dense<0.000000e+00> : vector<16x128xf32>
    %31 = tpu.matmul %30, %24, %cst_31 {dimension_numbers = #tpu.dot_dimension_numbers<[1], [0], [0], [1], [0, 0, 1, 1], [], []>} : vector<16x128xf32>, vector<128x128xf32>, vector<16x128xf32> -> vector<16x128xf32>
    %32 = arith.addf %22, %31 : vector<16x128xf32>
    %c2 = arith.constant 2 : index
    %c0_32 = arith.constant 0 : index
    %c0_33 = arith.constant 0 : index
    %33 = vector.load %arg2[%c2, %c0_32, %c0_33] : memref<5x128x128xf32, #tpu.memory_space<vmem>>, vector<1x128x128xf32>
    %34 = vector.shape_cast %33 : vector<1x128x128xf32> to vector<128x128xf32>
    %c0_34 = arith.constant 0 : index
    %c2_35 = arith.constant 2 : index
    %c0_36 = arith.constant 0 : index
    %35 = vector.load %arg1[%c0_34, %c2_35, %c0_36] : memref<2x20x128xf32, #tpu.memory_space<vmem>>, vector<1x16x128xf32>
    %36 = vector.shape_cast %35 : vector<1x16x128xf32> to vector<16x128xf32>
    %cst_37 = arith.constant dense<0.000000e+00> : vector<16x128xf32>
    %37 = tpu.matmul %36, %34, %cst_37 {dimension_numbers = #tpu.dot_dimension_numbers<[1], [0], [0], [1], [0, 0, 1, 1], [], []>} : vector<16x128xf32>, vector<128x128xf32>, vector<16x128xf32> -> vector<16x128xf32>
    %38 = arith.addf %28, %37 : vector<16x128xf32>
    %c1_38 = arith.constant 1 : index
    %c2_39 = arith.constant 2 : index
    %c0_40 = arith.constant 0 : index
    %39 = vector.load %arg1[%c1_38, %c2_39, %c0_40] : memref<2x20x128xf32, #tpu.memory_space<vmem>>, vector<1x16x128xf32>
    %40 = vector.shape_cast %39 : vector<1x16x128xf32> to vector<16x128xf32>
    %cst_41 = arith.constant dense<0.000000e+00> : vector<16x128xf32>
    %41 = tpu.matmul %40, %34, %cst_41 {dimension_numbers = #tpu.dot_dimension_numbers<[1], [0], [0], [1], [0, 0, 1, 1], [], []>} : vector<16x128xf32>, vector<128x128xf32>, vector<16x128xf32> -> vector<16x128xf32>
    %42 = arith.addf %32, %41 : vector<16x128xf32>
    %c3 = arith.constant 3 : index
    %c0_42 = arith.constant 0 : index
    %c0_43 = arith.constant 0 : index
    %43 = vector.load %arg2[%c3, %c0_42, %c0_43] : memref<5x128x128xf32, #tpu.memory_space<vmem>>, vector<1x128x128xf32>
    %44 = vector.shape_cast %43 : vector<1x128x128xf32> to vector<128x128xf32>
    %c0_44 = arith.constant 0 : index
    %c3_45 = arith.constant 3 : index
    %c0_46 = arith.constant 0 : index
    %45 = vector.load %arg1[%c0_44, %c3_45, %c0_46] : memref<2x20x128xf32, #tpu.memory_space<vmem>>, vector<1x16x128xf32>
    %46 = vector.shape_cast %45 : vector<1x16x128xf32> to vector<16x128xf32>
    %cst_47 = arith.constant dense<0.000000e+00> : vector<16x128xf32>
    %47 = tpu.matmul %46, %44, %cst_47 {dimension_numbers = #tpu.dot_dimension_numbers<[1], [0], [0], [1], [0, 0, 1, 1], [], []>} : vector<16x128xf32>, vector<128x128xf32>, vector<16x128xf32> -> vector<16x128xf32>
    %48 = arith.addf %38, %47 : vector<16x128xf32>
    %c1_48 = arith.constant 1 : index
    %c3_49 = arith.constant 3 : index
    %c0_50 = arith.constant 0 : index
    %49 = vector.load %arg1[%c1_48, %c3_49, %c0_50] : memref<2x20x128xf32, #tpu.memory_space<vmem>>, vector<1x16x128xf32>
    %50 = vector.shape_cast %49 : vector<1x16x128xf32> to vector<16x128xf32>
    %cst_51 = arith.constant dense<0.000000e+00> : vector<16x128xf32>
    %51 = tpu.matmul %50, %44, %cst_51 {dimension_numbers = #tpu.dot_dimension_numbers<[1], [0], [0], [1], [0, 0, 1, 1], [], []>} : vector<16x128xf32>, vector<128x128xf32>, vector<16x128xf32> -> vector<16x128xf32>
    %52 = arith.addf %42, %51 : vector<16x128xf32>
    %c4 = arith.constant 4 : index
    %c0_52 = arith.constant 0 : index
    %c0_53 = arith.constant 0 : index
    %53 = vector.load %arg2[%c4, %c0_52, %c0_53] : memref<5x128x128xf32, #tpu.memory_space<vmem>>, vector<1x128x128xf32>
    %54 = vector.shape_cast %53 : vector<1x128x128xf32> to vector<128x128xf32>
    %c0_54 = arith.constant 0 : index
    %c4_55 = arith.constant 4 : index
    %c0_56 = arith.constant 0 : index
    %55 = vector.load %arg1[%c0_54, %c4_55, %c0_56] : memref<2x20x128xf32, #tpu.memory_space<vmem>>, vector<1x16x128xf32>
    %56 = vector.shape_cast %55 : vector<1x16x128xf32> to vector<16x128xf32>
    %cst_57 = arith.constant dense<0.000000e+00> : vector<16x128xf32>
    %57 = tpu.matmul %56, %54, %cst_57 {dimension_numbers = #tpu.dot_dimension_numbers<[1], [0], [0], [1], [0, 0, 1, 1], [], []>} : vector<16x128xf32>, vector<128x128xf32>, vector<16x128xf32> -> vector<16x128xf32>
    %58 = arith.addf %48, %57 : vector<16x128xf32>
    %c1_58 = arith.constant 1 : index
    %c4_59 = arith.constant 4 : index
    %c0_60 = arith.constant 0 : index
    %59 = vector.load %arg1[%c1_58, %c4_59, %c0_60] : memref<2x20x128xf32, #tpu.memory_space<vmem>>, vector<1x16x128xf32>
    %60 = vector.shape_cast %59 : vector<1x16x128xf32> to vector<16x128xf32>
    %cst_61 = arith.constant dense<0.000000e+00> : vector<16x128xf32>
    %61 = tpu.matmul %60, %54, %cst_61 {dimension_numbers = #tpu.dot_dimension_numbers<[1], [0], [0], [1], [0, 0, 1, 1], [], []>} : vector<16x128xf32>, vector<128x128xf32>, vector<16x128xf32> -> vector<16x128xf32>
    %62 = arith.addf %52, %61 : vector<16x128xf32>
    %c0_62 = arith.constant 0 : index
    %c9 = arith.constant 9 : index
    %c0_63 = arith.constant 0 : index
    %63 = vector.load %arg9[%c0_62, %c9, %c0_63] : memref<2x34x128xf32, #tpu.memory_space<vmem>>, vector<1x16x128xf32>
    %64 = vector.shape_cast %63 : vector<1x16x128xf32> to vector<16x128xf32>
    %65 = vector.shape_cast %58 : vector<16x128xf32> to vector<1x16x128xf32>
    tpu.vector_store %arg9[%c0_62, %c9, %c0_63], %65 {strides = array<i32>} : memref<2x34x128xf32, #tpu.memory_space<vmem>>, vector<1x16x128xf32>,
    %c1_64 = arith.constant 1 : index
    %c9_65 = arith.constant 9 : index
    %c0_66 = arith.constant 0 : index
    %66 = vector.load %arg9[%c1_64, %c9_65, %c0_66] : memref<2x34x128xf32, #tpu.memory_space<vmem>>, vector<1x16x128xf32>
    %67 = vector.shape_cast %66 : vector<1x16x128xf32> to vector<16x128xf32>
    %68 = vector.shape_cast %62 : vector<16x128xf32> to vector<1x16x128xf32>
    tpu.vector_store %arg9[%c1_64, %c9_65, %c0_66], %68 {strides = array<i32>} : memref<2x34x128xf32, #tpu.memory_space<vmem>>, vector<1x16x128xf32>,
    %c0_67 = arith.constant 0 : index
    %c0_68 = arith.constant 0 : index
    %c0_69 = arith.constant 0 : index
    %69 = vector.load %arg4[%c0_67, %c0_68, %c0_69] : memref<7x128x128xf32, #tpu.memory_space<vmem>>, vector<1x128x128xf32>
    %70 = vector.shape_cast %69 : vector<1x128x128xf32> to vector<128x128xf32>
    %c0_70 = arith.constant 0 : index
    %c0_71 = arith.constant 0 : index
    %c0_72 = arith.constant 0 : index
    %71 = vector.load %arg9[%c0_70, %c0_71, %c0_72] : memref<2x34x128xf32, #tpu.memory_space<vmem>>, vector<1x16x128xf32>
    %72 = vector.shape_cast %71 : vector<1x16x128xf32> to vector<16x128xf32>
    %cst_73 = arith.constant dense<0.000000e+00> : vector<16x128xf32>
    %73 = tpu.matmul %72, %70, %cst_73 {dimension_numbers = #tpu.dot_dimension_numbers<[1], [0], [0], [1], [0, 0, 1, 1], [], []>} : vector<16x128xf32>, vector<128x128xf32>, vector<16x128xf32> -> vector<16x128xf32>
    %74 = arith.addf %9, %73 : vector<16x128xf32>
    %c1_74 = arith.constant 1 : index
    %c0_75 = arith.constant 0 : index
    %c0_76 = arith.constant 0 : index
    %75 = vector.load %arg9[%c1_74, %c0_75, %c0_76] : memref<2x34x128xf32, #tpu.memory_space<vmem>>, vector<1x16x128xf32>
    %76 = vector.shape_cast %75 : vector<1x16x128xf32> to vector<16x128xf32>
    %cst_77 = arith.constant dense<0.000000e+00> : vector<16x128xf32>
    %77 = tpu.matmul %76, %70, %cst_77 {dimension_numbers = #tpu.dot_dimension_numbers<[1], [0], [0], [1], [0, 0, 1, 1], [], []>} : vector<16x128xf32>, vector<128x128xf32>, vector<16x128xf32> -> vector<16x128xf32>
    %78 = arith.addf %9, %77 : vector<16x128xf32>
    %c1_78 = arith.constant 1 : index
    %c0_79 = arith.constant 0 : index
    %c0_80 = arith.constant 0 : index
    %79 = vector.load %arg4[%c1_78, %c0_79, %c0_80] : memref<7x128x128xf32, #tpu.memory_space<vmem>>, vector<1x128x128xf32>
    %80 = vector.shape_cast %79 : vector<1x128x128xf32> to vector<128x128xf32>
    %c0_81 = arith.constant 0 : index
    %c3_82 = arith.constant 3 : index
    %c0_83 = arith.constant 0 : index
    %81 = vector.load %arg9[%c0_81, %c3_82, %c0_83] : memref<2x34x128xf32, #tpu.memory_space<vmem>>, vector<1x16x128xf32>
    %82 = vector.shape_cast %81 : vector<1x16x128xf32> to vector<16x128xf32>
    %cst_84 = arith.constant dense<0.000000e+00> : vector<16x128xf32>
    %83 = tpu.matmul %82, %80, %cst_84 {dimension_numbers = #tpu.dot_dimension_numbers<[1], [0], [0], [1], [0, 0, 1, 1], [], []>} : vector<16x128xf32>, vector<128x128xf32>, vector<16x128xf32> -> vector<16x128xf32>
    %84 = arith.addf %74, %83 : vector<16x128xf32>
    %c1_85 = arith.constant 1 : index
    %c3_86 = arith.constant 3 : index
    %c0_87 = arith.constant 0 : index
    %85 = vector.load %arg9[%c1_85, %c3_86, %c0_87] : memref<2x34x128xf32, #tpu.memory_space<vmem>>, vector<1x16x128xf32>
    %86 = vector.shape_cast %85 : vector<1x16x128xf32> to vector<16x128xf32>
    %cst_88 = arith.constant dense<0.000000e+00> : vector<16x128xf32>
    %87 = tpu.matmul %86, %80, %cst_88 {dimension_numbers = #tpu.dot_dimension_numbers<[1], [0], [0], [1], [0, 0, 1, 1], [], []>} : vector<16x128xf32>, vector<128x128xf32>, vector<16x128xf32> -> vector<16x128xf32>
    %88 = arith.addf %78, %87 : vector<16x128xf32>
    %c2_89 = arith.constant 2 : index
    %c0_90 = arith.constant 0 : index
    %c0_91 = arith.constant 0 : index
    %89 = vector.load %arg4[%c2_89, %c0_90, %c0_91] : memref<7x128x128xf32, #tpu.memory_space<vmem>>, vector<1x128x128xf32>
    %90 = vector.shape_cast %89 : vector<1x128x128xf32> to vector<128x128xf32>
    %c0_92 = arith.constant 0 : index
    %c6 = arith.constant 6 : index
    %c0_93 = arith.constant 0 : index
    %91 = vector.load %arg9[%c0_92, %c6, %c0_93] : memref<2x34x128xf32, #tpu.memory_space<vmem>>, vector<1x16x128xf32>
    %92 = vector.shape_cast %91 : vector<1x16x128xf32> to vector<16x128xf32>
    %cst_94 = arith.constant dense<0.000000e+00> : vector<16x128xf32>
    %93 = tpu.matmul %92, %90, %cst_94 {dimension_numbers = #tpu.dot_dimension_numbers<[1], [0], [0], [1], [0, 0, 1, 1], [], []>} : vector<16x128xf32>, vector<128x128xf32>, vector<16x128xf32> -> vector<16x128xf32>
    %94 = arith.addf %84, %93 : vector<16x128xf32>
    %c1_95 = arith.constant 1 : index
    %c6_96 = arith.constant 6 : index
    %c0_97 = arith.constant 0 : index
    %95 = vector.load %arg9[%c1_95, %c6_96, %c0_97] : memref<2x34x128xf32, #tpu.memory_space<vmem>>, vector<1x16x128xf32>
    %96 = vector.shape_cast %95 : vector<1x16x128xf32> to vector<16x128xf32>
    %cst_98 = arith.constant dense<0.000000e+00> : vector<16x128xf32>
    %97 = tpu.matmul %96, %90, %cst_98 {dimension_numbers = #tpu.dot_dimension_numbers<[1], [0], [0], [1], [0, 0, 1, 1], [], []>} : vector<16x128xf32>, vector<128x128xf32>, vector<16x128xf32> -> vector<16x128xf32>
    %98 = arith.addf %88, %97 : vector<16x128xf32>
    %c3_99 = arith.constant 3 : index
    %c0_100 = arith.constant 0 : index
    %c0_101 = arith.constant 0 : index
    %99 = vector.load %arg4[%c3_99, %c0_100, %c0_101] : memref<7x128x128xf32, #tpu.memory_space<vmem>>, vector<1x128x128xf32>
    %100 = vector.shape_cast %99 : vector<1x128x128xf32> to vector<128x128xf32>
    %c0_102 = arith.constant 0 : index
    %c9_103 = arith.constant 9 : index
    %c0_104 = arith.constant 0 : index
    %101 = vector.load %arg9[%c0_102, %c9_103, %c0_104] : memref<2x34x128xf32, #tpu.memory_space<vmem>>, vector<1x16x128xf32>
    %102 = vector.shape_cast %101 : vector<1x16x128xf32> to vector<16x128xf32>
    %cst_105 = arith.constant dense<0.000000e+00> : vector<16x128xf32>
    %103 = tpu.matmul %102, %100, %cst_105 {dimension_numbers = #tpu.dot_dimension_numbers<[1], [0], [0], [1], [0, 0, 1, 1], [], []>} : vector<16x128xf32>, vector<128x128xf32>, vector<16x128xf32> -> vector<16x128xf32>
    %104 = arith.addf %94, %103 : vector<16x128xf32>
    %c1_106 = arith.constant 1 : index
    %c9_107 = arith.constant 9 : index
    %c0_108 = arith.constant 0 : index
    %105 = vector.load %arg9[%c1_106, %c9_107, %c0_108] : memref<2x34x128xf32, #tpu.memory_space<vmem>>, vector<1x16x128xf32>
    %106 = vector.shape_cast %105 : vector<1x16x128xf32> to vector<16x128xf32>
    %cst_109 = arith.constant dense<0.000000e+00> : vector<16x128xf32>
    %107 = tpu.matmul %106, %100, %cst_109 {dimension_numbers = #tpu.dot_dimension_numbers<[1], [0], [0], [1], [0, 0, 1, 1], [], []>} : vector<16x128xf32>, vector<128x128xf32>, vector<16x128xf32> -> vector<16x128xf32>
    %108 = arith.addf %98, %107 : vector<16x128xf32>
    %c4_110 = arith.constant 4 : index
    %c0_111 = arith.constant 0 : index
    %c0_112 = arith.constant 0 : index
    %109 = vector.load %arg4[%c4_110, %c0_111, %c0_112] : memref<7x128x128xf32, #tpu.memory_space<vmem>>, vector<1x128x128xf32>
    %110 = vector.shape_cast %109 : vector<1x128x128xf32> to vector<128x128xf32>
    %c0_113 = arith.constant 0 : index
    %c12 = arith.constant 12 : index
    %c0_114 = arith.constant 0 : index
    %111 = vector.load %arg9[%c0_113, %c12, %c0_114] : memref<2x34x128xf32, #tpu.memory_space<vmem>>, vector<1x16x128xf32>
    %112 = vector.shape_cast %111 : vector<1x16x128xf32> to vector<16x128xf32>
    %cst_115 = arith.constant dense<0.000000e+00> : vector<16x128xf32>
    %113 = tpu.matmul %112, %110, %cst_115 {dimension_numbers = #tpu.dot_dimension_numbers<[1], [0], [0], [1], [0, 0, 1, 1], [], []>} : vector<16x128xf32>, vector<128x128xf32>, vector<16x128xf32> -> vector<16x128xf32>
    %114 = arith.addf %104, %113 : vector<16x128xf32>
    %c1_116 = arith.constant 1 : index
    %c12_117 = arith.constant 12 : index
    %c0_118 = arith.constant 0 : index
    %115 = vector.load %arg9[%c1_116, %c12_117, %c0_118] : memref<2x34x128xf32, #tpu.memory_space<vmem>>, vector<1x16x128xf32>
    %116 = vector.shape_cast %115 : vector<1x16x128xf32> to vector<16x128xf32>
    %cst_119 = arith.constant dense<0.000000e+00> : vector<16x128xf32>
    %117 = tpu.matmul %116, %110, %cst_119 {dimension_numbers = #tpu.dot_dimension_numbers<[1], [0], [0], [1], [0, 0, 1, 1], [], []>} : vector<16x128xf32>, vector<128x128xf32>, vector<16x128xf32> -> vector<16x128xf32>
    %118 = arith.addf %108, %117 : vector<16x128xf32>
    %c5 = arith.constant 5 : index
    %c0_120 = arith.constant 0 : index
    %c0_121 = arith.constant 0 : index
    %119 = vector.load %arg4[%c5, %c0_120, %c0_121] : memref<7x128x128xf32, #tpu.memory_space<vmem>>, vector<1x128x128xf32>
    %120 = vector.shape_cast %119 : vector<1x128x128xf32> to vector<128x128xf32>
    %c0_122 = arith.constant 0 : index
    %c15 = arith.constant 15 : index
    %c0_123 = arith.constant 0 : index
    %121 = vector.load %arg9[%c0_122, %c15, %c0_123] : memref<2x34x128xf32, #tpu.memory_space<vmem>>, vector<1x16x128xf32>
    %122 = vector.shape_cast %121 : vector<1x16x128xf32> to vector<16x128xf32>
    %cst_124 = arith.constant dense<0.000000e+00> : vector<16x128xf32>
    %123 = tpu.matmul %122, %120, %cst_124 {dimension_numbers = #tpu.dot_dimension_numbers<[1], [0], [0], [1], [0, 0, 1, 1], [], []>} : vector<16x128xf32>, vector<128x128xf32>, vector<16x128xf32> -> vector<16x128xf32>
    %124 = arith.addf %114, %123 : vector<16x128xf32>
    %c1_125 = arith.constant 1 : index
    %c15_126 = arith.constant 15 : index
    %c0_127 = arith.constant 0 : index
    %125 = vector.load %arg9[%c1_125, %c15_126, %c0_127] : memref<2x34x128xf32, #tpu.memory_space<vmem>>, vector<1x16x128xf32>
    %126 = vector.shape_cast %125 : vector<1x16x128xf32> to vector<16x128xf32>
    %cst_128 = arith.constant dense<0.000000e+00> : vector<16x128xf32>
    %127 = tpu.matmul %126, %120, %cst_128 {dimension_numbers = #tpu.dot_dimension_numbers<[1], [0], [0], [1], [0, 0, 1, 1], [], []>} : vector<16x128xf32>, vector<128x128xf32>, vector<16x128xf32> -> vector<16x128xf32>
    %128 = arith.addf %118, %127 : vector<16x128xf32>
    %c6_129 = arith.constant 6 : index
    %c0_130 = arith.constant 0 : index
    %c0_131 = arith.constant 0 : index
    %129 = vector.load %arg4[%c6_129, %c0_130, %c0_131] : memref<7x128x128xf32, #tpu.memory_space<vmem>>, vector<1x128x128xf32>
    %130 = vector.shape_cast %129 : vector<1x128x128xf32> to vector<128x128xf32>
    %c0_132 = arith.constant 0 : index
    %c18 = arith.constant 18 : index
    %c0_133 = arith.constant 0 : index
    %131 = vector.load %arg9[%c0_132, %c18, %c0_133] : memref<2x34x128xf32, #tpu.memory_space<vmem>>, vector<1x16x128xf32>
    %132 = vector.shape_cast %131 : vector<1x16x128xf32> to vector<16x128xf32>
    %cst_134 = arith.constant dense<0.000000e+00> : vector<16x128xf32>
    %133 = tpu.matmul %132, %130, %cst_134 {dimension_numbers = #tpu.dot_dimension_numbers<[1], [0], [0], [1], [0, 0, 1, 1], [], []>} : vector<16x128xf32>, vector<128x128xf32>, vector<16x128xf32> -> vector<16x128xf32>
    %134 = arith.addf %124, %133 : vector<16x128xf32>
    %c1_135 = arith.constant 1 : index
    %c18_136 = arith.constant 18 : index
    %c0_137 = arith.constant 0 : index
    %135 = vector.load %arg9[%c1_135, %c18_136, %c0_137] : memref<2x34x128xf32, #tpu.memory_space<vmem>>, vector<1x16x128xf32>
    %136 = vector.shape_cast %135 : vector<1x16x128xf32> to vector<16x128xf32>
    %cst_138 = arith.constant dense<0.000000e+00> : vector<16x128xf32>
    %137 = tpu.matmul %136, %130, %cst_138 {dimension_numbers = #tpu.dot_dimension_numbers<[1], [0], [0], [1], [0, 0, 1, 1], [], []>} : vector<16x128xf32>, vector<128x128xf32>, vector<16x128xf32> -> vector<16x128xf32>
    %138 = arith.addf %128, %137 : vector<16x128xf32>
    %139 = tpu.concatenate %134, %138 in 0 : vector<16x128xf32>, vector<16x128xf32> -> vector<32x128xf32>
    %c0_139 = arith.constant 0 : index
    %c0_140 = arith.constant 0 : index
    %140 = vector.load %arg6[%c0_139, %c0_140] : memref<128x128xf32, #tpu.memory_space<vmem>>, vector<128x128xf32>
    %cst_141 = arith.constant dense<0.000000e+00> : vector<32x128xf32>
    %141 = tpu.matmul %139, %140, %cst_141 {dimension_numbers = #tpu.dot_dimension_numbers<[1], [0], [0], [1], [0, 0, 1, 1], [], []>} : vector<32x128xf32>, vector<128x128xf32>, vector<32x128xf32> -> vector<32x128xf32>
    %142 = arith.addf %141, %12 : vector<32x128xf32>
    %143 = vector.extract_strided_slice %142 {offsets = [0, 0], sizes = [16, 128], strides = [1, 1]} : vector<32x128xf32> to vector<16x128xf32>
    %c0_142 = arith.constant 0 : index
    %c2_143 = arith.constant 2 : index
    %c0_144 = arith.constant 0 : index
    %144 = vector.load %arg1[%c0_142, %c2_143, %c0_144] : memref<2x20x128xf32, #tpu.memory_space<vmem>>, vector<1x16x128xf32>
    %145 = vector.shape_cast %144 : vector<1x16x128xf32> to vector<16x128xf32>
    %146 = arith.mulf %145, %143 : vector<16x128xf32>
    %c0_145 = arith.constant 0 : index
    %c0_146 = arith.constant 0 : index
    %c0_147 = arith.constant 0 : index
    %147 = vector.load %arg8[%c0_145, %c0_146, %c0_147] : memref<2x16x128xf32, #tpu.memory_space<vmem>>, vector<1x16x128xf32>
    %148 = vector.shape_cast %147 : vector<1x16x128xf32> to vector<16x128xf32>
    %149 = vector.shape_cast %146 : vector<16x128xf32> to vector<1x16x128xf32>
    tpu.vector_store %arg8[%c0_145, %c0_146, %c0_147], %149 {strides = array<i32>} : memref<2x16x128xf32, #tpu.memory_space<vmem>>, vector<1x16x128xf32>,
    %150 = vector.extract_strided_slice %142 {offsets = [16, 0], sizes = [16, 128], strides = [1, 1]} : vector<32x128xf32> to vector<16x128xf32>
    %c1_148 = arith.constant 1 : index
    %c2_149 = arith.constant 2 : index
    %c0_150 = arith.constant 0 : index
    %151 = vector.load %arg1[%c1_148, %c2_149, %c0_150] : memref<2x20x128xf32, #tpu.memory_space<vmem>>, vector<1x16x128xf32>
    %152 = vector.shape_cast %151 : vector<1x16x128xf32> to vector<16x128xf32>
    %153 = arith.mulf %152, %150 : vector<16x128xf32>
    %c1_151 = arith.constant 1 : index
    %c0_152 = arith.constant 0 : index
    %c0_153 = arith.constant 0 : index
    %154 = vector.load %arg8[%c1_151, %c0_152, %c0_153] : memref<2x16x128xf32, #tpu.memory_space<vmem>>, vector<1x16x128xf32>
    %155 = vector.shape_cast %154 : vector<1x16x128xf32> to vector<16x128xf32>
    %156 = vector.shape_cast %153 : vector<16x128xf32> to vector<1x16x128xf32>
    tpu.vector_store %arg8[%c1_151, %c0_152, %c0_153], %156 {strides = array<i32>} : memref<2x16x128xf32, #tpu.memory_space<vmem>>, vector<1x16x128xf32>,
    return
  }
  func.func @transform_0(%arg0: i32) -> (i32, i32, i32) {
    %c0_i32 = arith.constant 0 : i32
    %c0_i32_0 = arith.constant 0 : i32
    %c0_i32_1 = arith.constant 0 : i32
    %c0_i32_2 = arith.constant 0 : i32
    return %c0_i32, %c0_i32_0, %c0_i32_1 : i32, i32, i32
  }
  func.func @transform_1(%arg0: i32) -> (i32, i32, i32) {
    %c0_i32 = arith.constant 0 : i32
    %c0_i32_0 = arith.constant 0 : i32
    %c0_i32_1 = arith.constant 0 : i32
    %c0_i32_2 = arith.constant 0 : i32
    return %c0_i32, %c0_i32_0, %c0_i32_1 : i32, i32, i32
  }
  func.func @transform_2(%arg0: i32) -> (i32, i32) {
    %c0_i32 = arith.constant 0 : i32
    %c0_i32_0 = arith.constant 0 : i32
    %c0_i32_1 = arith.constant 0 : i32
    return %c0_i32, %c0_i32_0 : i32, i32
  }
  func.func @transform_3(%arg0: i32) -> (i32, i32, i32) {
    %c0_i32 = arith.constant 0 : i32
    %c0_i32_0 = arith.constant 0 : i32
    %c0_i32_1 = arith.constant 0 : i32
    %c0_i32_2 = arith.constant 0 : i32
    return %c0_i32, %c0_i32_0, %c0_i32_1 : i32, i32, i32
  }
  func.func @transform_4(%arg0: i32) -> (i32, i32) {
    %c0_i32 = arith.constant 0 : i32
    %c0_i32_0 = arith.constant 0 : i32
    %c0_i32_1 = arith.constant 0 : i32
    return %c0_i32, %c0_i32_0 : i32, i32
  }
  func.func @transform_5(%arg0: i32) -> (i32, i32) {
    %c0_i32 = arith.constant 0 : i32
    %c0_i32_0 = arith.constant 0 : i32
    %c0_i32_1 = arith.constant 0 : i32
    return %c0_i32, %c0_i32_0 : i32, i32
  }
  func.func @transform_6(%arg0: i32) -> (i32, i32) {
    %c0_i32 = arith.constant 0 : i32
    %c0_i32_0 = arith.constant 0 : i32
    %c0_i32_1 = arith.constant 0 : i32
    return %c0_i32, %c0_i32_0 : i32, i32
  }
  func.func @transform_7(%arg0: i32) -> (i32, i32, i32) {
    %c0_i32 = arith.constant 0 : i32
    %c0_i32_0 = arith.constant 0 : i32
    %c0_i32_1 = arith.constant 0 : i32
    %c0_i32_2 = arith.constant 0 : i32
    return %c0_i32, %c0_i32_0, %c0_i32_1 : i32, i32, i32
  }
}

</mosaic_0001>

<llo_original>
// kernel: tpu_custom_call.1
$region0: #{tpu_custom_call.1}
  #allocation0 [shape = 'u32[]', space=smem, size = 0x4, offset = 0x4, fixed_abs, tag = 'smem constant byte address 0x4 - core index']
  #allocation1 [shape = 'u32[144,128]{1,0:T(1,128)}', space=vmem, size = 0x12000, scoped, tag = 'internal scratch']
  #allocation2 [shape = 'f32[2,34,128]{2,1,0:T(8,128)}', space=vmem, size = 0xa000, scoped, tag = 'scratch operand']
  %s0 = inlined_call_operand.vmem [shape: f32[2,20,128], index: 0, kind: input, shape index: {}]
  %s1 = inlined_call_operand.hbm [shape: f32[5,128,128], index: 1, kind: input, shape index: {}]
  %s2 = inlined_call_operand.vmem [shape: f32[1,128], index: 2, kind: input, shape index: {}]
  %s3 = inlined_call_operand.hbm [shape: f32[7,128,128], index: 3, kind: input, shape index: {}]
  %s4 = inlined_call_operand.vmem [shape: f32[1,128], index: 4, kind: input, shape index: {}]
  %s5 = inlined_call_operand.hbm [shape: f32[128,128], index: 5, kind: input, shape index: {}]
  %s6 = inlined_call_operand.vmem [shape: f32[1,128], index: 6, kind: input, shape index: {}]
  %s7 = inlined_call_operand.hbm [shape: f32[2,16,128], index: 7, kind: output, shape index: {}]
  %s8 = sld [smem:[#allocation0]]
  $region50: #{tpu_custom_call.1} parent=0
    _
  %s10 = ssub.s32 1, %s8
  %s11 = scalar_select 0, %s10, %s8
  $region1: #{tpu_custom_call.1} parent=0
    #allocation3 [shape = 'u8[327680]{0}', space=vmem, size = 0x50000, scoped, tag = 'input window, operand 1, single buffered']
    #allocation4 [shape = 's32[1]{0}', space=sflag, size = 0x4, scoped, tag = 'scoped memory for tpu_custom_call.1']
    #allocation5 [shape = 's32[1]{0}', space=sflag, size = 0x4, scoped, tag = 'scoped memory for tpu_custom_call.1']
    #allocation6 [shape = 'u8[458752]{0}', space=vmem, size = 0x70000, scoped, tag = 'input window, operand 3, single buffered']
    #allocation7 [shape = 's32[1]{0}', space=sflag, size = 0x4, scoped, tag = 'scoped memory for tpu_custom_call.1']
    #allocation8 [shape = 'u8[65536]{0}', space=vmem, size = 0x10000, scoped, tag = 'input window, operand 5, single buffered']
    #allocation9 [shape = 'u8[16384]{0}', space=vmem, size = 0x4000, scoped, tag = 'output window, operand 0, single buffered']
    %12 = vsyncpa [#allocation4], 0
    %13 = vsyncpa [#allocation7], 0
    %14 = vsyncpa [#allocation5], 0
    // Predicated region
    $region2: #{tpu_custom_call.1} parent=1 // pred_check
      _
    $region3: #{tpu_custom_call.1} parent=1 // pred_check_branch
      %16 = sbr.rel (0) target = $region5
    $region4: #{tpu_custom_call.1} parent=1 // pred_region
      _
    $region5: #{tpu_custom_call.1} parent=1 // pred_fallthru
      _
    // Predicated region
    $region6: #{tpu_custom_call.1} parent=1 // pred_check
      _
    $region7: #{tpu_custom_call.1} parent=1 // pred_check_branch
      %18 = sbr.rel (0) target = $region9
    $region8: #{tpu_custom_call.1} parent=1 // pred_region
      %s20 = ssub.s32 10240, 10240
      %21 = vsyncadd [#allocation4], %s20
      %s22 = sshll.u32 [#allocation3], 4
      %s23 = int_to_ptr.vmem [resolvable:$true] %s22
      %28 = dma.hbm_to_vmem [thread:$0]  %s1, 10240, %s23, [#allocation4], 128, 128, 8
    $region9: #{tpu_custom_call.1} parent=1 // pred_fallthru
      _
    // Predicated region
    $region10: #{tpu_custom_call.1} parent=1 // pred_check
      _
    $region11: #{tpu_custom_call.1} parent=1 // pred_check_branch
      %30 = sbr.rel (0) target = $region13
    $region12: #{tpu_custom_call.1} parent=1 // pred_region
      _
    $region13: #{tpu_custom_call.1} parent=1 // pred_fallthru
      _
    // Predicated region
    $region14: #{tpu_custom_call.1} parent=1 // pred_check
      _
    $region15: #{tpu_custom_call.1} parent=1 // pred_check_branch
      %32 = sbr.rel (0) target = $region17
    $region16: #{tpu_custom_call.1} parent=1 // pred_region
      %s34 = ssub.s32 14336, 14336
      %35 = vsyncadd [#allocation7], %s34
      %s36 = sshll.u32 [#allocation6], 4
      %s37 = int_to_ptr.vmem [resolvable:$true] %s36
      %42 = dma.hbm_to_vmem [thread:$0]  %s3, 14336, %s37, [#allocation7], 128, 128, 8
    $region17: #{tpu_custom_call.1} parent=1 // pred_fallthru
      _
    // Predicated region
    $region18: #{tpu_custom_call.1} parent=1 // pred_check
      _
    $region19: #{tpu_custom_call.1} parent=1 // pred_check_branch
      %44 = sbr.rel (0) target = $region21
    $region20: #{tpu_custom_call.1} parent=1 // pred_region
      _
    $region21: #{tpu_custom_call.1} parent=1 // pred_fallthru
      _
    // Predicated region
    $region22: #{tpu_custom_call.1} parent=1 // pred_check
      _
    $region23: #{tpu_custom_call.1} parent=1 // pred_check_branch
      %46 = sbr.rel (0) target = $region25
    $region24: #{tpu_custom_call.1} parent=1 // pred_region
      %s48 = ssub.s32 2048, 2048
      %49 = vsyncadd [#allocation7], %s48
      %s50 = sshll.u32 [#allocation8], 4
      %s51 = int_to_ptr.vmem [resolvable:$true] %s50
      %56 = dma.hbm_to_vmem [thread:$0]  %s5, 2048, %s51, [#allocation7], 128, 128, 8
    $region25: #{tpu_custom_call.1} parent=1 // pred_fallthru
      _
    // Predicated region
    $region26: #{tpu_custom_call.1} parent=1 // pred_check
      _
    $region27: #{tpu_custom_call.1} parent=1 // pred_check_branch
      %58 = sbr.rel (0) target = $region29
    $region28: #{tpu_custom_call.1} parent=1 // pred_region
      _
    $region29: #{tpu_custom_call.1} parent=1 // pred_fallthru
      _
    // Predicated region
    $region30: #{tpu_custom_call.1} parent=1 // pred_check
      _
    $region31: #{tpu_custom_call.1} parent=1 // pred_check_branch
      %60 = sbr.rel (0) target = $region33
    $region32: #{tpu_custom_call.1} parent=1 // pred_region
      %61 = dma.done [#allocation4], 10240
    $region33: #{tpu_custom_call.1} parent=1 // pred_fallthru
      _
    // Predicated region
    $region34: #{tpu_custom_call.1} parent=1 // pred_check
      _
    $region35: #{tpu_custom_call.1} parent=1 // pred_check_branch
      %63 = sbr.rel (0) target = $region37
    $region36: #{tpu_custom_call.1} parent=1 // pred_region
      %64 = dma.done [#allocation7], 14336
    $region37: #{tpu_custom_call.1} parent=1 // pred_fallthru
      _
    // Predicated region
    $region38: #{tpu_custom_call.1} parent=1 // pred_check
      _
    $region39: #{tpu_custom_call.1} parent=1 // pred_check_branch
      %66 = sbr.rel (0) target = $region41
    $region40: #{tpu_custom_call.1} parent=1 // pred_region
      %67 = dma.done [#allocation7], 2048
    $region41: #{tpu_custom_call.1} parent=1 // pred_fallthru
      _
    %68 = vst [vmem:[#allocation2] sm:$0xff] 0.0
    %69 = vst [vmem:[#allocation2 + $0x8] sm:$0x1] 0.0
    %70 = vst [vmem:[#allocation2 + $0x28] sm:$0xff] 0.0
    %71 = vst [vmem:[#allocation2 + $0x30] sm:$0x1] 0.0
    %72 = vst [vmem:[#allocation2 + $0x19] sm:$0xff] 0.0
    %73 = vst [vmem:[#allocation2 + $0x21] sm:$0x1] 0.0
    %74 = vst [vmem:[#allocation2 + $0x41] sm:$0xff] 0.0
    %75 = vst [vmem:[#allocation2 + $0x49] sm:$0x1] 0.0
    %v76 = vld [vmem:[%s2] sm:$0x1]
    %v78 = vlaneseq
    %v79 = vshrl.u32 %v78, 7
    %v80 = vsub.s32 0, %v79
    %v81 = vrot.slane %v76, %v80
    %v83 = vld [vmem:[%s4] sm:$0x1]
    %v85 = vlaneseq
    %v86 = vshrl.u32 %v85, 7
    %v87 = vsub.s32 0, %v86
    %v88 = vrot.slane %v83, %v87
    %v90 = vld [vmem:[%s6] sm:$0x1]
    %v92 = vlaneseq
    %v93 = vshrl.u32 %v92, 7
    %v94 = vsub.s32 0, %v93
    %v95 = vrot.slane %v90, %v94
    %v97 = vld [vmem:[#allocation3] sm:$0xff]
    %v98 = vld [vmem:[#allocation3 + $0x8] sm:$0xff]
    %v99 = vld [vmem:[#allocation3 + $0x10] sm:$0xff]
    %v100 = vld [vmem:[#allocation3 + $0x18] sm:$0xff]
    %v101 = vld [vmem:[#allocation3 + $0x20] sm:$0xff]
    %v102 = vld [vmem:[#allocation3 + $0x28] sm:$0xff]
    %v103 = vld [vmem:[#allocation3 + $0x30] sm:$0xff]
    %v104 = vld [vmem:[#allocation3 + $0x38] sm:$0xff]
    %v105 = vld [vmem:[#allocation3 + $0x40] sm:$0xff]
    %v106 = vld [vmem:[#allocation3 + $0x48] sm:$0xff]
    %v107 = vld [vmem:[#allocation3 + $0x50] sm:$0xff]
    %v108 = vld [vmem:[#allocation3 + $0x58] sm:$0xff]
    %v109 = vld [vmem:[#allocation3 + $0x60] sm:$0xff]
    %v110 = vld [vmem:[#allocation3 + $0x68] sm:$0xff]
    %v111 = vld [vmem:[#allocation3 + $0x70] sm:$0xff]
    %v112 = vld [vmem:[#allocation3 + $0x78] sm:$0xff]
    %v113 = vld [vmem:[%s0] sm:$0xff]
    %v114 = vld [vmem:[%s0 + $0x8] sm:$0xff]
    %115 = vmatprep.subr.mxu0 0.0
    %116 = vmatpush1.msra.mxu0 %v97
    %117 = vmatprep.subr.mxu0 0.0
    %118 = vmatpush1.msra.mxu0 %v98
    %119 = vmatprep.subr.mxu0 0.0
    %120 = vmatpush1.msra.mxu0 %v99
    %121 = vmatprep.subr.mxu0 0.0
    %122 = vmatpush1.msra.mxu0 %v100
    %123 = vmatprep.subr.mxu0 0.0
    %124 = vmatpush1.msra.mxu0 %v101
    %125 = vmatprep.subr.mxu0 0.0
    %126 = vmatpush1.msra.mxu0 %v102
    %127 = vmatprep.subr.mxu0 0.0
    %128 = vmatpush1.msra.mxu0 %v103
    %129 = vmatprep.subr.mxu0 0.0
    %130 = vmatpush1.msra.mxu0 %v104
    %131 = vmatprep.subr.mxu0 0.0
    %132 = vmatpush1.msra.mxu0 %v105
    %133 = vmatprep.subr.mxu0 0.0
    %134 = vmatpush1.msra.mxu0 %v106
    %135 = vmatprep.subr.mxu0 0.0
    %136 = vmatpush1.msra.mxu0 %v107
    %137 = vmatprep.subr.mxu0 0.0
    %138 = vmatpush1.msra.mxu0 %v108
    %139 = vmatprep.subr.mxu0 0.0
    %140 = vmatpush1.msra.mxu0 %v109
    %141 = vmatprep.subr.mxu0 0.0
    %142 = vmatpush1.msra.mxu0 %v110
    %143 = vmatprep.subr.mxu0 0.0
    %144 = vmatpush1.msra.mxu0 %v111
    %145 = vmatprep.subr.mxu0 0.0
    %146 = vmatpush1.msra.mxu0 %v112
    %147 = vmatprep.subr.mxu0 0.0
    %148 = vmatpush1.msra.mxu0 0.0
    %149 = vmatprep.subr.mxu0 0.0
    %150 = vmatpush1.msra.mxu0 0.0
    %151 = vmatprep.subr.mxu0 0.0
    %152 = vmatpush1.msra.mxu0 0.0
    %153 = vmatprep.subr.mxu0 0.0
    %154 = vmatpush1.msra.mxu0 0.0
    %155 = vmatprep.subr.mxu0 0.0
    %156 = vmatpush1.msra.mxu0 0.0
    %157 = vmatprep.subr.mxu0 0.0
    %158 = vmatpush1.msra.mxu0 0.0
    %159 = vmatprep.subr.mxu0 0.0
    %160 = vmatpush1.msra.mxu0 0.0
    %161 = vmatprep.subr.mxu0 0.0
    %162 = vmatpush1.msra.mxu0 0.0
    %163 = vmatprep.subr.mxu0 0.0
    %164 = vmatpush1.msra.mxu0 0.0
    %165 = vmatprep.subr.mxu0 0.0
    %166 = vmatpush1.msra.mxu0 0.0
    %167 = vmatprep.subr.mxu0 0.0
    %168 = vmatpush1.msra.mxu0 0.0
    %169 = vmatprep.subr.mxu0 0.0
    %170 = vmatpush1.msra.mxu0 0.0
    %171 = vmatprep.subr.mxu0 0.0
    %172 = vmatpush1.msra.mxu0 0.0
    %173 = vmatprep.subr.mxu0 0.0
    %174 = vmatpush1.msra.mxu0 0.0
    %175 = vmatprep.subr.mxu0 0.0
    %176 = vmatpush1.msra.mxu0 0.0
    %177 = vmatprep.subr.mxu0 0.0
    %178 = vmatpush1.msra.mxu0 0.0
    %179 = vmatprep.mubr.f32.mxu0 0.0
    %180 = vmatmul.mubr.f32.gmra.mrb[0].mxu0 %v113
    %v181 = vpop.f32.mrb[0].mxu0
    %v182 = vadd.f32 0.0, %v181
    %v183 = vpop.f32.mrb[0].mxu0
    %184 = vmatprep.mubr.f32.mxu0 0.0
    %185 = vmatmul.mubr.f32.gmra.mrb[0].mxu0 %v114
    %v186 = vpop.f32.mrb[0].mxu0
    %v187 = vadd.f32 0.0, %v186
    %v188 = vpop.f32.mrb[0].mxu0
    %189 = vdwg.mxu0
    %v190 = vadd.f32 %v81, %v182
    %v191 = vadd.f32 %v81, %v187
    %s192 = scalar_lea.vmem %s0, 24
    %v193 = vld [vmem:[%s192] sm:$0xff]
    %v194 = vld [vmem:[%s192 + $0x8] sm:$0xff]
    %195 = vmatprep.subr.mxu0 0.0
    %196 = vmatpush1.msra.mxu0 %v97
    %197 = vmatprep.subr.mxu0 0.0
    %198 = vmatpush1.msra.mxu0 %v98
    %199 = vmatprep.subr.mxu0 0.0
    %200 = vmatpush1.msra.mxu0 %v99
    %201 = vmatprep.subr.mxu0 0.0
    %202 = vmatpush1.msra.mxu0 %v100
    %203 = vmatprep.subr.mxu0 0.0
    %204 = vmatpush1.msra.mxu0 %v101
    %205 = vmatprep.subr.mxu0 0.0
    %206 = vmatpush1.msra.mxu0 %v102
    %207 = vmatprep.subr.mxu0 0.0
    %208 = vmatpush1.msra.mxu0 %v103
    %209 = vmatprep.subr.mxu0 0.0
    %210 = vmatpush1.msra.mxu0 %v104
    %211 = vmatprep.subr.mxu0 0.0
    %212 = vmatpush1.msra.mxu0 %v105
    %213 = vmatprep.subr.mxu0 0.0
    %214 = vmatpush1.msra.mxu0 %v106
    %215 = vmatprep.subr.mxu0 0.0
    %216 = vmatpush1.msra.mxu0 %v107
    %217 = vmatprep.subr.mxu0 0.0
    %218 = vmatpush1.msra.mxu0 %v108
    %219 = vmatprep.subr.mxu0 0.0
    %220 = vmatpush1.msra.mxu0 %v109
    %221 = vmatprep.subr.mxu0 0.0
    %222 = vmatpush1.msra.mxu0 %v110
    %223 = vmatprep.subr.mxu0 0.0
    %224 = vmatpush1.msra.mxu0 %v111
    %225 = vmatprep.subr.mxu0 0.0
    %226 = vmatpush1.msra.mxu0 %v112
    %227 = vmatprep.subr.mxu0 0.0
    %228 = vmatpush1.msra.mxu0 0.0
    %229 = vmatprep.subr.mxu0 0.0
    %230 = vmatpush1.msra.mxu0 0.0
    %231 = vmatprep.subr.mxu0 0.0
    %232 = vmatpush1.msra.mxu0 0.0
    %233 = vmatprep.subr.mxu0 0.0
    %234 = vmatpush1.msra.mxu0 0.0
    %235 = vmatprep.subr.mxu0 0.0
    %236 = vmatpush1.msra.mxu0 0.0
    %237 = vmatprep.subr.mxu0 0.0
    %238 = vmatpush1.msra.mxu0 0.0
    %239 = vmatprep.subr.mxu0 0.0
    %240 = vmatpush1.msra.mxu0 0.0
    %241 = vmatprep.subr.mxu0 0.0
    %242 = vmatpush1.msra.mxu0 0.0
    %243 = vmatprep.subr.mxu0 0.0
    %244 = vmatpush1.msra.mxu0 0.0
    %245 = vmatprep.subr.mxu0 0.0
    %246 = vmatpush1.msra.mxu0 0.0
    %247 = vmatprep.subr.mxu0 0.0
    %248 = vmatpush1.msra.mxu0 0.0
    %249 = vmatprep.subr.mxu0 0.0
    %250 = vmatpush1.msra.mxu0 0.0
    %251 = vmatprep.subr.mxu0 0.0
    %252 = vmatpush1.msra.mxu0 0.0
    %253 = vmatprep.subr.mxu0 0.0
    %254 = vmatpush1.msra.mxu0 0.0
    %255 = vmatprep.subr.mxu0 0.0
    %256 = vmatpush1.msra.mxu0 0.0
    %257 = vmatprep.subr.mxu0 0.0
    %258 = vmatpush1.msra.mxu0 0.0
    %259 = vmatprep.mubr.f32.mxu0 0.0
    %260 = vmatmul.mubr.f32.gmra.mrb[0].mxu0 %v193
    %v261 = vpop.f32.mrb[0].mxu0
    %v262 = vadd.f32 0.0, %v261
    %v263 = vpop.f32.mrb[0].mxu0
    %264 = vmatprep.mubr.f32.mxu0 0.0
    %265 = vmatmul.mubr.f32.gmra.mrb[0].mxu0 %v194
    %v266 = vpop.f32.mrb[0].mxu0
    %v267 = vadd.f32 0.0, %v266
    %v268 = vpop.f32.mrb[0].mxu0
    %269 = vdwg.mxu0
    %v270 = vadd.f32 %v81, %v262
    %v271 = vadd.f32 %v81, %v267
    %s272 = scalar_lea.vmem [#allocation3], 128
    %v273 = vld [vmem:[%s272] sm:$0xff]
    %v274 = vld [vmem:[%s272 + $0x8] sm:$0xff]
    %v275 = vld [vmem:[%s272 + $0x10] sm:$0xff]
    %v276 = vld [vmem:[%s272 + $0x18] sm:$0xff]
    %v277 = vld [vmem:[%s272 + $0x20] sm:$0xff]
    %v278 = vld [vmem:[%s272 + $0x28] sm:$0xff]
    %v279 = vld [vmem:[%s272 + $0x30] sm:$0xff]
    %v280 = vld [vmem:[%s272 + $0x38] sm:$0xff]
    %v281 = vld [vmem:[%s272 + $0x40] sm:$0xff]
    %v282 = vld [vmem:[%s272 + $0x48] sm:$0xff]
    %v283 = vld [vmem:[%s272 + $0x50] sm:$0xff]
    %v284 = vld [vmem:[%s272 + $0x58] sm:$0xff]
    %v285 = vld [vmem:[%s272 + $0x60] sm:$0xff]
    %v286 = vld [vmem:[%s272 + $0x68] sm:$0xff]
    %v287 = vld [vmem:[%s272 + $0x70] sm:$0xff]
    %v288 = vld [vmem:[%s272 + $0x78] sm:$0xff]
    %v289 = vld [vmem:[%s0 + $0x1] sm:$0xff]
    %v290 = vld [vmem:[%s0 + $0x9] sm:$0xff]
    %291 = vmatprep.subr.mxu0 0.0
    %292 = vmatpush1.msra.mxu0 %v273
    %293 = vmatprep.subr.mxu0 0.0
    %294 = vmatpush1.msra.mxu0 %v274
    %295 = vmatprep.subr.mxu0 0.0
    %296 = vmatpush1.msra.mxu0 %v275
    %297 = vmatprep.subr.mxu0 0.0
    %298 = vmatpush1.msra.mxu0 %v276
    %299 = vmatprep.subr.mxu0 0.0
    %300 = vmatpush1.msra.mxu0 %v277
    %301 = vmatprep.subr.mxu0 0.0
    %302 = vmatpush1.msra.mxu0 %v278
    %303 = vmatprep.subr.mxu0 0.0
    %304 = vmatpush1.msra.mxu0 %v279
    %305 = vmatprep.subr.mxu0 0.0
    %306 = vmatpush1.msra.mxu0 %v280
    %307 = vmatprep.subr.mxu0 0.0
    %308 = vmatpush1.msra.mxu0 %v281
    %309 = vmatprep.subr.mxu0 0.0
    %310 = vmatpush1.msra.mxu0 %v282
    %311 = vmatprep.subr.mxu0 0.0
    %312 = vmatpush1.msra.mxu0 %v283
    %313 = vmatprep.subr.mxu0 0.0
    %314 = vmatpush1.msra.mxu0 %v284
    %315 = vmatprep.subr.mxu0 0.0
    %316 = vmatpush1.msra.mxu0 %v285
    %317 = vmatprep.subr.mxu0 0.0
    %318 = vmatpush1.msra.mxu0 %v286
    %319 = vmatprep.subr.mxu0 0.0
    %320 = vmatpush1.msra.mxu0 %v287
    %321 = vmatprep.subr.mxu0 0.0
    %322 = vmatpush1.msra.mxu0 %v288
    %323 = vmatprep.subr.mxu0 0.0
    %324 = vmatpush1.msra.mxu0 0.0
    %325 = vmatprep.subr.mxu0 0.0
    %326 = vmatpush1.msra.mxu0 0.0
    %327 = vmatprep.subr.mxu0 0.0
    %328 = vmatpush1.msra.mxu0 0.0
    %329 = vmatprep.subr.mxu0 0.0
    %330 = vmatpush1.msra.mxu0 0.0
    %331 = vmatprep.subr.mxu0 0.0
    %332 = vmatpush1.msra.mxu0 0.0
    %333 = vmatprep.subr.mxu0 0.0
    %334 = vmatpush1.msra.mxu0 0.0
    %335 = vmatprep.subr.mxu0 0.0
    %336 = vmatpush1.msra.mxu0 0.0
    %337 = vmatprep.subr.mxu0 0.0
    %338 = vmatpush1.msra.mxu0 0.0
    %339 = vmatprep.subr.mxu0 0.0
    %340 = vmatpush1.msra.mxu0 0.0
    %341 = vmatprep.subr.mxu0 0.0
    %342 = vmatpush1.msra.mxu0 0.0
    %343 = vmatprep.subr.mxu0 0.0
    %344 = vmatpush1.msra.mxu0 0.0
    %345 = vmatprep.subr.mxu0 0.0
    %346 = vmatpush1.msra.mxu0 0.0
    %347 = vmatprep.subr.mxu0 0.0
    %348 = vmatpush1.msra.mxu0 0.0
    %349 = vmatprep.subr.mxu0 0.0
    %350 = vmatpush1.msra.mxu0 0.0
    %351 = vmatprep.subr.mxu0 0.0
    %352 = vmatpush1.msra.mxu0 0.0
    %353 = vmatprep.subr.mxu0 0.0
    %354 = vmatpush1.msra.mxu0 0.0
    %355 = vmatprep.mubr.f32.mxu0 0.0
    %356 = vmatmul.mubr.f32.gmra.mrb[0].mxu0 %v289
    %v357 = vpop.f32.mrb[0].mxu0
    %v358 = vadd.f32 0.0, %v357
    %v359 = vpop.f32.mrb[0].mxu0
    %360 = vmatprep.mubr.f32.mxu0 0.0
    %361 = vmatmul.mubr.f32.gmra.mrb[0].mxu0 %v290
    %v362 = vpop.f32.mrb[0].mxu0
    %v363 = vadd.f32 0.0, %v362
    %v364 = vpop.f32.mrb[0].mxu0
    %365 = vdwg.mxu0
    %v366 = vadd.f32 %v190, %v358
    %v367 = vadd.f32 %v191, %v363
    %v368 = vld [vmem:[%s192 + $0x1] sm:$0xff]
    %v369 = vld [vmem:[%s192 + $0x9] sm:$0xff]
    %370 = vmatprep.subr.mxu0 0.0
    %371 = vmatpush1.msra.mxu0 %v273
    %372 = vmatprep.subr.mxu0 0.0
    %373 = vmatpush1.msra.mxu0 %v274
    %374 = vmatprep.subr.mxu0 0.0
    %375 = vmatpush1.msra.mxu0 %v275
    %376 = vmatprep.subr.mxu0 0.0
    %377 = vmatpush1.msra.mxu0 %v276
    %378 = vmatprep.subr.mxu0 0.0
    %379 = vmatpush1.msra.mxu0 %v277
    %380 = vmatprep.subr.mxu0 0.0
    %381 = vmatpush1.msra.mxu0 %v278
    %382 = vmatprep.subr.mxu0 0.0
    %383 = vmatpush1.msra.mxu0 %v279
    %384 = vmatprep.subr.mxu0 0.0
    %385 = vmatpush1.msra.mxu0 %v280
    %386 = vmatprep.subr.mxu0 0.0
    %387 = vmatpush1.msra.mxu0 %v281
    %388 = vmatprep.subr.mxu0 0.0
    %389 = vmatpush1.msra.mxu0 %v282
    %390 = vmatprep.subr.mxu0 0.0
    %391 = vmatpush1.msra.mxu0 %v283
    %392 = vmatprep.subr.mxu0 0.0
    %393 = vmatpush1.msra.mxu0 %v284
    %394 = vmatprep.subr.mxu0 0.0
    %395 = vmatpush1.msra.mxu0 %v285
    %396 = vmatprep.subr.mxu0 0.0
    %397 = vmatpush1.msra.mxu0 %v286
    %398 = vmatprep.subr.mxu0 0.0
    %399 = vmatpush1.msra.mxu0 %v287
    %400 = vmatprep.subr.mxu0 0.0
    %401 = vmatpush1.msra.mxu0 %v288
    %402 = vmatprep.subr.mxu0 0.0
    %403 = vmatpush1.msra.mxu0 0.0
    %404 = vmatprep.subr.mxu0 0.0
    %405 = vmatpush1.msra.mxu0 0.0
    %406 = vmatprep.subr.mxu0 0.0
    %407 = vmatpush1.msra.mxu0 0.0
    %408 = vmatprep.subr.mxu0 0.0
    %409 = vmatpush1.msra.mxu0 0.0
    %410 = vmatprep.subr.mxu0 0.0
    %411 = vmatpush1.msra.mxu0 0.0
    %412 = vmatprep.subr.mxu0 0.0
    %413 = vmatpush1.msra.mxu0 0.0
    %414 = vmatprep.subr.mxu0 0.0
    %415 = vmatpush1.msra.mxu0 0.0
    %416 = vmatprep.subr.mxu0 0.0
    %417 = vmatpush1.msra.mxu0 0.0
    %418 = vmatprep.subr.mxu0 0.0
    %419 = vmatpush1.msra.mxu0 0.0
    %420 = vmatprep.subr.mxu0 0.0
    %421 = vmatpush1.msra.mxu0 0.0
    %422 = vmatprep.subr.mxu0 0.0
    %423 = vmatpush1.msra.mxu0 0.0
    %424 = vmatprep.subr.mxu0 0.0
    %425 = vmatpush1.msra.mxu0 0.0
    %426 = vmatprep.subr.mxu0 0.0
    %427 = vmatpush1.msra.mxu0 0.0
    %428 = vmatprep.subr.mxu0 0.0
    %429 = vmatpush1.msra.mxu0 0.0
    %430 = vmatprep.subr.mxu0 0.0
    %431 = vmatpush1.msra.mxu0 0.0
    %432 = vmatprep.subr.mxu0 0.0
    %433 = vmatpush1.msra.mxu0 0.0
    %434 = vmatprep.mubr.f32.mxu0 0.0
    %435 = vmatmul.mubr.f32.gmra.mrb[0].mxu0 %v368
    %v436 = vpop.f32.mrb[0].mxu0
    %v437 = vadd.f32 0.0, %v436
    %v438 = vpop.f32.mrb[0].mxu0
    %439 = vmatprep.mubr.f32.mxu0 0.0
    %440 = vmatmul.mubr.f32.gmra.mrb[0].mxu0 %v369
    %v441 = vpop.f32.mrb[0].mxu0
    %v442 = vadd.f32 0.0, %v441
    %v443 = vpop.f32.mrb[0].mxu0
    %444 = vdwg.mxu0
    %v445 = vadd.f32 %v270, %v437
    %v446 = vadd.f32 %v271, %v442
    %s447 = scalar_lea.vmem [#allocation3], 256
    %v448 = vld [vmem:[%s447] sm:$0xff]
    %v449 = vld [vmem:[%s447 + $0x8] sm:$0xff]
    %v450 = vld [vmem:[%s447 + $0x10] sm:$0xff]
    %v451 = vld [vmem:[%s447 + $0x18] sm:$0xff]
    %v452 = vld [vmem:[%s447 + $0x20] sm:$0xff]
    %v453 = vld [vmem:[%s447 + $0x28] sm:$0xff]
    %v454 = vld [vmem:[%s447 + $0x30] sm:$0xff]
    %v455 = vld [vmem:[%s447 + $0x38] sm:$0xff]
    %v456 = vld [vmem:[%s447 + $0x40] sm:$0xff]
    %v457 = vld [vmem:[%s447 + $0x48] sm:$0xff]
    %v458 = vld [vmem:[%s447 + $0x50] sm:$0xff]
    %v459 = vld [vmem:[%s447 + $0x58] sm:$0xff]
    %v460 = vld [vmem:[%s447 + $0x60] sm:$0xff]
    %v461 = vld [vmem:[%s447 + $0x68] sm:$0xff]
    %v462 = vld [vmem:[%s447 + $0x70] sm:$0xff]
    %v463 = vld [vmem:[%s447 + $0x78] sm:$0xff]
    %v464 = vld [vmem:[%s0 + $0x2] sm:$0xff]
    %v465 = vld [vmem:[%s0 + $0xa] sm:$0xff]
    %466 = vmatprep.subr.mxu0 0.0
    %467 = vmatpush1.msra.mxu0 %v448
    %468 = vmatprep.subr.mxu0 0.0
    %469 = vmatpush1.msra.mxu0 %v449
    %470 = vmatprep.subr.mxu0 0.0
    %471 = vmatpush1.msra.mxu0 %v450
    %472 = vmatprep.subr.mxu0 0.0
    %473 = vmatpush1.msra.mxu0 %v451
    %474 = vmatprep.subr.mxu0 0.0
    %475 = vmatpush1.msra.mxu0 %v452
    %476 = vmatprep.subr.mxu0 0.0
    %477 = vmatpush1.msra.mxu0 %v453
    %478 = vmatprep.subr.mxu0 0.0
    %479 = vmatpush1.msra.mxu0 %v454
    %480 = vmatprep.subr.mxu0 0.0
    %481 = vmatpush1.msra.mxu0 %v455
    %482 = vmatprep.subr.mxu0 0.0
    %483 = vmatpush1.msra.mxu0 %v456
    %484 = vmatprep.subr.mxu0 0.0
    %485 = vmatpush1.msra.mxu0 %v457
    %486 = vmatprep.subr.mxu0 0.0
    %487 = vmatpush1.msra.mxu0 %v458
    %488 = vmatprep.subr.mxu0 0.0
    %489 = vmatpush1.msra.mxu0 %v459
    %490 = vmatprep.subr.mxu0 0.0
    %491 = vmatpush1.msra.mxu0 %v460
    %492 = vmatprep.subr.mxu0 0.0
    %493 = vmatpush1.msra.mxu0 %v461
    %494 = vmatprep.subr.mxu0 0.0
    %495 = vmatpush1.msra.mxu0 %v462
    %496 = vmatprep.subr.mxu0 0.0
    %497 = vmatpush1.msra.mxu0 %v463
    %498 = vmatprep.subr.mxu0 0.0
    %499 = vmatpush1.msra.mxu0 0.0
    %500 = vmatprep.subr.mxu0 0.0
    %501 = vmatpush1.msra.mxu0 0.0
    %502 = vmatprep.subr.mxu0 0.0
    %503 = vmatpush1.msra.mxu0 0.0
    %504 = vmatprep.subr.mxu0 0.0
    %505 = vmatpush1.msra.mxu0 0.0
    %506 = vmatprep.subr.mxu0 0.0
    %507 = vmatpush1.msra.mxu0 0.0
    %508 = vmatprep.subr.mxu0 0.0
    %509 = vmatpush1.msra.mxu0 0.0
    %510 = vmatprep.subr.mxu0 0.0
    %511 = vmatpush1.msra.mxu0 0.0
    %512 = vmatprep.subr.mxu0 0.0
    %513 = vmatpush1.msra.mxu0 0.0
    %514 = vmatprep.subr.mxu0 0.0
    %515 = vmatpush1.msra.mxu0 0.0
    %516 = vmatprep.subr.mxu0 0.0
    %517 = vmatpush1.msra.mxu0 0.0
    %518 = vmatprep.subr.mxu0 0.0
    %519 = vmatpush1.msra.mxu0 0.0
    %520 = vmatprep.subr.mxu0 0.0
    %521 = vmatpush1.msra.mxu0 0.0
    %522 = vmatprep.subr.mxu0 0.0
    %523 = vmatpush1.msra.mxu0 0.0
    %524 = vmatprep.subr.mxu0 0.0
    %525 = vmatpush1.msra.mxu0 0.0
    %526 = vmatprep.subr.mxu0 0.0
    %527 = vmatpush1.msra.mxu0 0.0
    %528 = vmatprep.subr.mxu0 0.0
    %529 = vmatpush1.msra.mxu0 0.0
    %530 = vmatprep.mubr.f32.mxu0 0.0
    %531 = vmatmul.mubr.f32.gmra.mrb[0].mxu0 %v464
    %v532 = vpop.f32.mrb[0].mxu0
    %v533 = vadd.f32 0.0, %v532
    %v534 = vpop.f32.mrb[0].mxu0
    %535 = vmatprep.mubr.f32.mxu0 0.0
    %536 = vmatmul.mubr.f32.gmra.mrb[0].mxu0 %v465
    %v537 = vpop.f32.mrb[0].mxu0
    %v538 = vadd.f32 0.0, %v537
    %v539 = vpop.f32.mrb[0].mxu0
    %540 = vdwg.mxu0
    %v541 = vadd.f32 %v366, %v533
    %v542 = vadd.f32 %v367, %v538
    %v543 = vld [vmem:[%s192 + $0x2] sm:$0xff]
    %v544 = vld [vmem:[%s192 + $0xa] sm:$0xff]
    %545 = vmatprep.subr.mxu0 0.0
    %546 = vmatpush1.msra.mxu0 %v448
    %547 = vmatprep.subr.mxu0 0.0
    %548 = vmatpush1.msra.mxu0 %v449
    %549 = vmatprep.subr.mxu0 0.0
    %550 = vmatpush1.msra.mxu0 %v450
    %551 = vmatprep.subr.mxu0 0.0
    %552 = vmatpush1.msra.mxu0 %v451
    %553 = vmatprep.subr.mxu0 0.0
    %554 = vmatpush1.msra.mxu0 %v452
    %555 = vmatprep.subr.mxu0 0.0
    %556 = vmatpush1.msra.mxu0 %v453
    %557 = vmatprep.subr.mxu0 0.0
    %558 = vmatpush1.msra.mxu0 %v454
    %559 = vmatprep.subr.mxu0 0.0
    %560 = vmatpush1.msra.mxu0 %v455
    %561 = vmatprep.subr.mxu0 0.0
    %562 = vmatpush1.msra.mxu0 %v456
    %563 = vmatprep.subr.mxu0 0.0
    %564 = vmatpush1.msra.mxu0 %v457
    %565 = vmatprep.subr.mxu0 0.0
    %566 = vmatpush1.msra.mxu0 %v458
    %567 = vmatprep.subr.mxu0 0.0
    %568 = vmatpush1.msra.mxu0 %v459
    %569 = vmatprep.subr.mxu0 0.0
    %570 = vmatpush1.msra.mxu0 %v460
    %571 = vmatprep.subr.mxu0 0.0
    %572 = vmatpush1.msra.mxu0 %v461
    %573 = vmatprep.subr.mxu0 0.0
    %574 = vmatpush1.msra.mxu0 %v462
    %575 = vmatprep.subr.mxu0 0.0
    %576 = vmatpush1.msra.mxu0 %v463
    %577 = vmatprep.subr.mxu0 0.0
    %578 = vmatpush1.msra.mxu0 0.0
    %579 = vmatprep.subr.mxu0 0.0
    %580 = vmatpush1.msra.mxu0 0.0
    %581 = vmatprep.subr.mxu0 0.0
    %582 = vmatpush1.msra.mxu0 0.0
    %583 = vmatprep.subr.mxu0 0.0
    %584 = vmatpush1.msra.mxu0 0.0
    %585 = vmatprep.subr.mxu0 0.0
    %586 = vmatpush1.msra.mxu0 0.0
    %587 = vmatprep.subr.mxu0 0.0
    %588 = vmatpush1.msra.mxu0 0.0
    %589 = vmatprep.subr.mxu0 0.0
    %590 = vmatpush1.msra.mxu0 0.0
    %591 = vmatprep.subr.mxu0 0.0
    %592 = vmatpush1.msra.mxu0 0.0
    %593 = vmatprep.subr.mxu0 0.0
    %594 = vmatpush1.msra.mxu0 0.0
    %595 = vmatprep.subr.mxu0 0.0
    %596 = vmatpush1.msra.mxu0 0.0
    %597 = vmatprep.subr.mxu0 0.0
    %598 = vmatpush1.msra.mxu0 0.0
    %599 = vmatprep.subr.mxu0 0.0
    %600 = vmatpush1.msra.mxu0 0.0
    %601 = vmatprep.subr.mxu0 0.0
    %602 = vmatpush1.msra.mxu0 0.0
    %603 = vmatprep.subr.mxu0 0.0
    %604 = vmatpush1.msra.mxu0 0.0
    %605 = vmatprep.subr.mxu0 0.0
    %606 = vmatpush1.msra.mxu0 0.0
    %607 = vmatprep.subr.mxu0 0.0
    %608 = vmatpush1.msra.mxu0 0.0
    %609 = vmatprep.mubr.f32.mxu0 0.0
    %610 = vmatmul.mubr.f32.gmra.mrb[0].mxu0 %v543
    %v611 = vpop.f32.mrb[0].mxu0
    %v612 = vadd.f32 0.0, %v611
    %v613 = vpop.f32.mrb[0].mxu0
    %614 = vmatprep.mubr.f32.mxu0 0.0
    %615 = vmatmul.mubr.f32.gmra.mrb[0].mxu0 %v544
    %v616 = vpop.f32.mrb[0].mxu0
    %v617 = vadd.f32 0.0, %v616
    %v618 = vpop.f32.mrb[0].mxu0
    %619 = vdwg.mxu0
    %v620 = vadd.f32 %v445, %v612
    %v621 = vadd.f32 %v446, %v617
    %s622 = scalar_lea.vmem [#allocation3], 384
    %v623 = vld [vmem:[%s622] sm:$0xff]
    %v624 = vld [vmem:[%s622 + $0x8] sm:$0xff]
    %v625 = vld [vmem:[%s622 + $0x10] sm:$0xff]
    %v626 = vld [vmem:[%s622 + $0x18] sm:$0xff]
    %v627 = vld [vmem:[%s622 + $0x20] sm:$0xff]
    %v628 = vld [vmem:[%s622 + $0x28] sm:$0xff]
    %v629 = vld [vmem:[%s622 + $0x30] sm:$0xff]
    %v630 = vld [vmem:[%s622 + $0x38] sm:$0xff]
    %v631 = vld [vmem:[%s622 + $0x40] sm:$0xff]
    %v632 = vld [vmem:[%s622 + $0x48] sm:$0xff]
    %v633 = vld [vmem:[%s622 + $0x50] sm:$0xff]
    %v634 = vld [vmem:[%s622 + $0x58] sm:$0xff]
    %v635 = vld [vmem:[%s622 + $0x60] sm:$0xff]
    %v636 = vld [vmem:[%s622 + $0x68] sm:$0xff]
    %v637 = vld [vmem:[%s622 + $0x70] sm:$0xff]
    %v638 = vld [vmem:[%s622 + $0x78] sm:$0xff]
    %v639 = vld [vmem:[%s0 + $0x3] sm:$0xff]
    %v640 = vld [vmem:[%s0 + $0xb] sm:$0xff]
    %641 = vmatprep.subr.mxu0 0.0
    %642 = vmatpush1.msra.mxu0 %v623
    %643 = vmatprep.subr.mxu0 0.0
    %644 = vmatpush1.msra.mxu0 %v624
    %645 = vmatprep.subr.mxu0 0.0
    %646 = vmatpush1.msra.mxu0 %v625
    %647 = vmatprep.subr.mxu0 0.0
    %648 = vmatpush1.msra.mxu0 %v626
    %649 = vmatprep.subr.mxu0 0.0
    %650 = vmatpush1.msra.mxu0 %v627
    %651 = vmatprep.subr.mxu0 0.0
    %652 = vmatpush1.msra.mxu0 %v628
    %653 = vmatprep.subr.mxu0 0.0
    %654 = vmatpush1.msra.mxu0 %v629
    %655 = vmatprep.subr.mxu0 0.0
    %656 = vmatpush1.msra.mxu0 %v630
    %657 = vmatprep.subr.mxu0 0.0
    %658 = vmatpush1.msra.mxu0 %v631
    %659 = vmatprep.subr.mxu0 0.0
    %660 = vmatpush1.msra.mxu0 %v632
    %661 = vmatprep.subr.mxu0 0.0
    %662 = vmatpush1.msra.mxu0 %v633
    %663 = vmatprep.subr.mxu0 0.0
    %664 = vmatpush1.msra.mxu0 %v634
    %665 = vmatprep.subr.mxu0 0.0
    %666 = vmatpush1.msra.mxu0 %v635
    %667 = vmatprep.subr.mxu0 0.0
    %668 = vmatpush1.msra.mxu0 %v636
    %669 = vmatprep.subr.mxu0 0.0
    %670 = vmatpush1.msra.mxu0 %v637
    %671 = vmatprep.subr.mxu0 0.0
    %672 = vmatpush1.msra.mxu0 %v638
    %673 = vmatprep.subr.mxu0 0.0
    %674 = vmatpush1.msra.mxu0 0.0
    %675 = vmatprep.subr.mxu0 0.0
    %676 = vmatpush1.msra.mxu0 0.0
    %677 = vmatprep.subr.mxu0 0.0
    %678 = vmatpush1.msra.mxu0 0.0
    %679 = vmatprep.subr.mxu0 0.0
    %680 = vmatpush1.msra.mxu0 0.0
    %681 = vmatprep.subr.mxu0 0.0
    %682 = vmatpush1.msra.mxu0 0.0
    %683 = vmatprep.subr.mxu0 0.0
    %684 = vmatpush1.msra.mxu0 0.0
    %685 = vmatprep.subr.mxu0 0.0
    %686 = vmatpush1.msra.mxu0 0.0
    %687 = vmatprep.subr.mxu0 0.0
    %688 = vmatpush1.msra.mxu0 0.0
    %689 = vmatprep.subr.mxu0 0.0
    %690 = vmatpush1.msra.mxu0 0.0
    %691 = vmatprep.subr.mxu0 0.0
    %692 = vmatpush1.msra.mxu0 0.0
    %693 = vmatprep.subr.mxu0 0.0
    %694 = vmatpush1.msra.mxu0 0.0
    %695 = vmatprep.subr.mxu0 0.0
    %696 = vmatpush1.msra.mxu0 0.0
    %697 = vmatprep.subr.mxu0 0.0
    %698 = vmatpush1.msra.mxu0 0.0
    %699 = vmatprep.subr.mxu0 0.0
    %700 = vmatpush1.msra.mxu0 0.0
    %701 = vmatprep.subr.mxu0 0.0
    %702 = vmatpush1.msra.mxu0 0.0
    %703 = vmatprep.subr.mxu0 0.0
    %704 = vmatpush1.msra.mxu0 0.0
    %705 = vmatprep.mubr.f32.mxu0 0.0
    %706 = vmatmul.mubr.f32.gmra.mrb[0].mxu0 %v639
    %v707 = vpop.f32.mrb[0].mxu0
    %v708 = vadd.f32 0.0, %v707
    %v709 = vpop.f32.mrb[0].mxu0
    %710 = vmatprep.mubr.f32.mxu0 0.0
    %711 = vmatmul.mubr.f32.gmra.mrb[0].mxu0 %v640
    %v712 = vpop.f32.mrb[0].mxu0
    %v713 = vadd.f32 0.0, %v712
    %v714 = vpop.f32.mrb[0].mxu0
    %715 = vdwg.mxu0
    %v716 = vadd.f32 %v541, %v708
    %v717 = vadd.f32 %v542, %v713
    %v718 = vld [vmem:[%s192 + $0x3] sm:$0xff]
    %v719 = vld [vmem:[%s192 + $0xb] sm:$0xff]
    %720 = vmatprep.subr.mxu0 0.0
    %721 = vmatpush1.msra.mxu0 %v623
    %722 = vmatprep.subr.mxu0 0.0
    %723 = vmatpush1.msra.mxu0 %v624
    %724 = vmatprep.subr.mxu0 0.0
    %725 = vmatpush1.msra.mxu0 %v625
    %726 = vmatprep.subr.mxu0 0.0
    %727 = vmatpush1.msra.mxu0 %v626
    %728 = vmatprep.subr.mxu0 0.0
    %729 = vmatpush1.msra.mxu0 %v627
    %730 = vmatprep.subr.mxu0 0.0
    %731 = vmatpush1.msra.mxu0 %v628
    %732 = vmatprep.subr.mxu0 0.0
    %733 = vmatpush1.msra.mxu0 %v629
    %734 = vmatprep.subr.mxu0 0.0
    %735 = vmatpush1.msra.mxu0 %v630
    %736 = vmatprep.subr.mxu0 0.0
    %737 = vmatpush1.msra.mxu0 %v631
    %738 = vmatprep.subr.mxu0 0.0
    %739 = vmatpush1.msra.mxu0 %v632
    %740 = vmatprep.subr.mxu0 0.0
    %741 = vmatpush1.msra.mxu0 %v633
    %742 = vmatprep.subr.mxu0 0.0
    %743 = vmatpush1.msra.mxu0 %v634
    %744 = vmatprep.subr.mxu0 0.0
    %745 = vmatpush1.msra.mxu0 %v635
    %746 = vmatprep.subr.mxu0 0.0
    %747 = vmatpush1.msra.mxu0 %v636
    %748 = vmatprep.subr.mxu0 0.0
    %749 = vmatpush1.msra.mxu0 %v637
    %750 = vmatprep.subr.mxu0 0.0
    %751 = vmatpush1.msra.mxu0 %v638
    %752 = vmatprep.subr.mxu0 0.0
    %753 = vmatpush1.msra.mxu0 0.0
    %754 = vmatprep.subr.mxu0 0.0
    %755 = vmatpush1.msra.mxu0 0.0
    %756 = vmatprep.subr.mxu0 0.0
    %757 = vmatpush1.msra.mxu0 0.0
    %758 = vmatprep.subr.mxu0 0.0
    %759 = vmatpush1.msra.mxu0 0.0
    %760 = vmatprep.subr.mxu0 0.0
    %761 = vmatpush1.msra.mxu0 0.0
    %762 = vmatprep.subr.mxu0 0.0
    %763 = vmatpush1.msra.mxu0 0.0
    %764 = vmatprep.subr.mxu0 0.0
    %765 = vmatpush1.msra.mxu0 0.0
    %766 = vmatprep.subr.mxu0 0.0
    %767 = vmatpush1.msra.mxu0 0.0
    %768 = vmatprep.subr.mxu0 0.0
    %769 = vmatpush1.msra.mxu0 0.0
    %770 = vmatprep.subr.mxu0 0.0
    %771 = vmatpush1.msra.mxu0 0.0
    %772 = vmatprep.subr.mxu0 0.0
    %773 = vmatpush1.msra.mxu0 0.0
    %774 = vmatprep.subr.mxu0 0.0
    %775 = vmatpush1.msra.mxu0 0.0
    %776 = vmatprep.subr.mxu0 0.0
    %777 = vmatpush1.msra.mxu0 0.0
    %778 = vmatprep.subr.mxu0 0.0
    %779 = vmatpush1.msra.mxu0 0.0
    %780 = vmatprep.subr.mxu0 0.0
    %781 = vmatpush1.msra.mxu0 0.0
    %782 = vmatprep.subr.mxu0 0.0
    %783 = vmatpush1.msra.mxu0 0.0
    %784 = vmatprep.mubr.f32.mxu0 0.0
    %785 = vmatmul.mubr.f32.gmra.mrb[0].mxu0 %v718
    %v786 = vpop.f32.mrb[0].mxu0
    %v787 = vadd.f32 0.0, %v786
    %v788 = vpop.f32.mrb[0].mxu0
    %789 = vmatprep.mubr.f32.mxu0 0.0
    %790 = vmatmul.mubr.f32.gmra.mrb[0].mxu0 %v719
    %v791 = vpop.f32.mrb[0].mxu0
    %v792 = vadd.f32 0.0, %v791
    %v793 = vpop.f32.mrb[0].mxu0
    %794 = vdwg.mxu0
    %v795 = vadd.f32 %v620, %v787
    %v796 = vadd.f32 %v621, %v792
    %s797 = scalar_lea.vmem [#allocation3], 512
    %v798 = vld [vmem:[%s797] sm:$0xff]
    %v799 = vld [vmem:[%s797 + $0x8] sm:$0xff]
    %v800 = vld [vmem:[%s797 + $0x10] sm:$0xff]
    %v801 = vld [vmem:[%s797 + $0x18] sm:$0xff]
    %v802 = vld [vmem:[%s797 + $0x20] sm:$0xff]
    %v803 = vld [vmem:[%s797 + $0x28] sm:$0xff]
    %v804 = vld [vmem:[%s797 + $0x30] sm:$0xff]
    %v805 = vld [vmem:[%s797 + $0x38] sm:$0xff]
    %v806 = vld [vmem:[%s797 + $0x40] sm:$0xff]
    %v807 = vld [vmem:[%s797 + $0x48] sm:$0xff]
    %v808 = vld [vmem:[%s797 + $0x50] sm:$0xff]
    %v809 = vld [vmem:[%s797 + $0x58] sm:$0xff]
    %v810 = vld [vmem:[%s797 + $0x60] sm:$0xff]
    %v811 = vld [vmem:[%s797 + $0x68] sm:$0xff]
    %v812 = vld [vmem:[%s797 + $0x70] sm:$0xff]
    %v813 = vld [vmem:[%s797 + $0x78] sm:$0xff]
    %v814 = vld [vmem:[%s0 + $0x4] sm:$0xff]
    %v815 = vld [vmem:[%s0 + $0xc] sm:$0xff]
    %816 = vmatprep.subr.mxu0 0.0
    %817 = vmatpush1.msra.mxu0 %v798
    %818 = vmatprep.subr.mxu0 0.0
    %819 = vmatpush1.msra.mxu0 %v799
    %820 = vmatprep.subr.mxu0 0.0
    %821 = vmatpush1.msra.mxu0 %v800
    %822 = vmatprep.subr.mxu0 0.0
    %823 = vmatpush1.msra.mxu0 %v801
    %824 = vmatprep.subr.mxu0 0.0
    %825 = vmatpush1.msra.mxu0 %v802
    %826 = vmatprep.subr.mxu0 0.0
    %827 = vmatpush1.msra.mxu0 %v803
    %828 = vmatprep.subr.mxu0 0.0
    %829 = vmatpush1.msra.mxu0 %v804
    %830 = vmatprep.subr.mxu0 0.0
    %831 = vmatpush1.msra.mxu0 %v805
    %832 = vmatprep.subr.mxu0 0.0
    %833 = vmatpush1.msra.mxu0 %v806
    %834 = vmatprep.subr.mxu0 0.0
    %835 = vmatpush1.msra.mxu0 %v807
    %836 = vmatprep.subr.mxu0 0.0
    %837 = vmatpush1.msra.mxu0 %v808
    %838 = vmatprep.subr.mxu0 0.0
    %839 = vmatpush1.msra.mxu0 %v809
    %840 = vmatprep.subr.mxu0 0.0
    %841 = vmatpush1.msra.mxu0 %v810
    %842 = vmatprep.subr.mxu0 0.0
    %843 = vmatpush1.msra.mxu0 %v811
    %844 = vmatprep.subr.mxu0 0.0
    %845 = vmatpush1.msra.mxu0 %v812
    %846 = vmatprep.subr.mxu0 0.0
    %847 = vmatpush1.msra.mxu0 %v813
    %848 = vmatprep.subr.mxu0 0.0
    %849 = vmatpush1.msra.mxu0 0.0
    %850 = vmatprep.subr.mxu0 0.0
    %851 = vmatpush1.msra.mxu0 0.0
    %852 = vmatprep.subr.mxu0 0.0
    %853 = vmatpush1.msra.mxu0 0.0
    %854 = vmatprep.subr.mxu0 0.0
    %855 = vmatpush1.msra.mxu0 0.0
    %856 = vmatprep.subr.mxu0 0.0
    %857 = vmatpush1.msra.mxu0 0.0
    %858 = vmatprep.subr.mxu0 0.0
    %859 = vmatpush1.msra.mxu0 0.0
    %860 = vmatprep.subr.mxu0 0.0
    %861 = vmatpush1.msra.mxu0 0.0
    %862 = vmatprep.subr.mxu0 0.0
    %863 = vmatpush1.msra.mxu0 0.0
    %864 = vmatprep.subr.mxu0 0.0
    %865 = vmatpush1.msra.mxu0 0.0
    %866 = vmatprep.subr.mxu0 0.0
    %867 = vmatpush1.msra.mxu0 0.0
    %868 = vmatprep.subr.mxu0 0.0
    %869 = vmatpush1.msra.mxu0 0.0
    %870 = vmatprep.subr.mxu0 0.0
    %871 = vmatpush1.msra.mxu0 0.0
    %872 = vmatprep.subr.mxu0 0.0
    %873 = vmatpush1.msra.mxu0 0.0
    %874 = vmatprep.subr.mxu0 0.0
    %875 = vmatpush1.msra.mxu0 0.0
    %876 = vmatprep.subr.mxu0 0.0
    %877 = vmatpush1.msra.mxu0 0.0
    %878 = vmatprep.subr.mxu0 0.0
    %879 = vmatpush1.msra.mxu0 0.0
    %880 = vmatprep.mubr.f32.mxu0 0.0
    %881 = vmatmul.mubr.f32.gmra.mrb[0].mxu0 %v814
    %v882 = vpop.f32.mrb[0].mxu0
    %v883 = vadd.f32 0.0, %v882
    %v884 = vpop.f32.mrb[0].mxu0
    %885 = vmatprep.mubr.f32.mxu0 0.0
    %886 = vmatmul.mubr.f32.gmra.mrb[0].mxu0 %v815
    %v887 = vpop.f32.mrb[0].mxu0
    %v888 = vadd.f32 0.0, %v887
    %v889 = vpop.f32.mrb[0].mxu0
    %890 = vdwg.mxu0
    %v891 = vadd.f32 %v716, %v883
    %v892 = vadd.f32 %v717, %v888
    %v893 = vld [vmem:[%s192 + $0x4] sm:$0xff]
    %v894 = vld [vmem:[%s192 + $0xc] sm:$0xff]
    %895 = vmatprep.subr.mxu0 0.0
    %896 = vmatpush1.msra.mxu0 %v798
    %897 = vmatprep.subr.mxu0 0.0
    %898 = vmatpush1.msra.mxu0 %v799
    %899 = vmatprep.subr.mxu0 0.0
    %900 = vmatpush1.msra.mxu0 %v800
    %901 = vmatprep.subr.mxu0 0.0
    %902 = vmatpush1.msra.mxu0 %v801
    %903 = vmatprep.subr.mxu0 0.0
    %904 = vmatpush1.msra.mxu0 %v802
    %905 = vmatprep.subr.mxu0 0.0
    %906 = vmatpush1.msra.mxu0 %v803
    %907 = vmatprep.subr.mxu0 0.0
    %908 = vmatpush1.msra.mxu0 %v804
    %909 = vmatprep.subr.mxu0 0.0
    %910 = vmatpush1.msra.mxu0 %v805
    %911 = vmatprep.subr.mxu0 0.0
    %912 = vmatpush1.msra.mxu0 %v806
    %913 = vmatprep.subr.mxu0 0.0
    %914 = vmatpush1.msra.mxu0 %v807
    %915 = vmatprep.subr.mxu0 0.0
    %916 = vmatpush1.msra.mxu0 %v808
    %917 = vmatprep.subr.mxu0 0.0
    %918 = vmatpush1.msra.mxu0 %v809
    %919 = vmatprep.subr.mxu0 0.0
    %920 = vmatpush1.msra.mxu0 %v810
    %921 = vmatprep.subr.mxu0 0.0
    %922 = vmatpush1.msra.mxu0 %v811
    %923 = vmatprep.subr.mxu0 0.0
    %924 = vmatpush1.msra.mxu0 %v812
    %925 = vmatprep.subr.mxu0 0.0
    %926 = vmatpush1.msra.mxu0 %v813
    %927 = vmatprep.subr.mxu0 0.0
    %928 = vmatpush1.msra.mxu0 0.0
    %929 = vmatprep.subr.mxu0 0.0
    %930 = vmatpush1.msra.mxu0 0.0
    %931 = vmatprep.subr.mxu0 0.0
    %932 = vmatpush1.msra.mxu0 0.0
    %933 = vmatprep.subr.mxu0 0.0
    %934 = vmatpush1.msra.mxu0 0.0
    %935 = vmatprep.subr.mxu0 0.0
    %936 = vmatpush1.msra.mxu0 0.0
    %937 = vmatprep.subr.mxu0 0.0
    %938 = vmatpush1.msra.mxu0 0.0
    %939 = vmatprep.subr.mxu0 0.0
    %940 = vmatpush1.msra.mxu0 0.0
    %941 = vmatprep.subr.mxu0 0.0
    %942 = vmatpush1.msra.mxu0 0.0
    %943 = vmatprep.subr.mxu0 0.0
    %944 = vmatpush1.msra.mxu0 0.0
    %945 = vmatprep.subr.mxu0 0.0
    %946 = vmatpush1.msra.mxu0 0.0
    %947 = vmatprep.subr.mxu0 0.0
    %948 = vmatpush1.msra.mxu0 0.0
    %949 = vmatprep.subr.mxu0 0.0
    %950 = vmatpush1.msra.mxu0 0.0
    %951 = vmatprep.subr.mxu0 0.0
    %952 = vmatpush1.msra.mxu0 0.0
    %953 = vmatprep.subr.mxu0 0.0
    %954 = vmatpush1.msra.mxu0 0.0
    %955 = vmatprep.subr.mxu0 0.0
    %956 = vmatpush1.msra.mxu0 0.0
    %957 = vmatprep.subr.mxu0 0.0
    %958 = vmatpush1.msra.mxu0 0.0
    %959 = vmatprep.mubr.f32.mxu0 0.0
    %960 = vmatmul.mubr.f32.gmra.mrb[0].mxu0 %v893
    %v961 = vpop.f32.mrb[0].mxu0
    %v962 = vadd.f32 0.0, %v961
    %v963 = vpop.f32.mrb[0].mxu0
    %964 = vmatprep.mubr.f32.mxu0 0.0
    %965 = vmatmul.mubr.f32.gmra.mrb[0].mxu0 %v894
    %v966 = vpop.f32.mrb[0].mxu0
    %v967 = vadd.f32 0.0, %v966
    %v968 = vpop.f32.mrb[0].mxu0
    %969 = vdwg.mxu0
    %v970 = vadd.f32 %v795, %v962
    %v971 = vadd.f32 %v796, %v967
    %972 = vst [vmem:[#allocation2 + $0x9] sm:$0xff] %v891
    %973 = vst [vmem:[#allocation2 + $0x11] sm:$0xff] %v892
    %s974 = scalar_lea.vmem [#allocation2], 40
    %975 = vst [vmem:[%s974 + $0x9] sm:$0xff] %v970
    %976 = vst [vmem:[%s974 + $0x11] sm:$0xff] %v971
    %v977 = vld [vmem:[#allocation6] sm:$0xff]
    %v978 = vld [vmem:[#allocation6 + $0x8] sm:$0xff]
    %v979 = vld [vmem:[#allocation6 + $0x10] sm:$0xff]
    %v980 = vld [vmem:[#allocation6 + $0x18] sm:$0xff]
    %v981 = vld [vmem:[#allocation6 + $0x20] sm:$0xff]
    %v982 = vld [vmem:[#allocation6 + $0x28] sm:$0xff]
    %v983 = vld [vmem:[#allocation6 + $0x30] sm:$0xff]
    %v984 = vld [vmem:[#allocation6 + $0x38] sm:$0xff]
    %v985 = vld [vmem:[#allocation6 + $0x40] sm:$0xff]
    %v986 = vld [vmem:[#allocation6 + $0x48] sm:$0xff]
    %v987 = vld [vmem:[#allocation6 + $0x50] sm:$0xff]
    %v988 = vld [vmem:[#allocation6 + $0x58] sm:$0xff]
    %v989 = vld [vmem:[#allocation6 + $0x60] sm:$0xff]
    %v990 = vld [vmem:[#allocation6 + $0x68] sm:$0xff]
    %v991 = vld [vmem:[#allocation6 + $0x70] sm:$0xff]
    %v992 = vld [vmem:[#allocation6 + $0x78] sm:$0xff]
    %v993 = vld [vmem:[#allocation2] sm:$0xff]
    %v994 = vld [vmem:[#allocation2 + $0x8] sm:$0xff]
    %995 = vmatprep.subr.mxu0 0.0
    %996 = vmatpush1.msra.mxu0 %v977
    %997 = vmatprep.subr.mxu0 0.0
    %998 = vmatpush1.msra.mxu0 %v978
    %999 = vmatprep.subr.mxu0 0.0
    %1000 = vmatpush1.msra.mxu0 %v979
    %1001 = vmatprep.subr.mxu0 0.0
    %1002 = vmatpush1.msra.mxu0 %v980
    %1003 = vmatprep.subr.mxu0 0.0
    %1004 = vmatpush1.msra.mxu0 %v981
    %1005 = vmatprep.subr.mxu0 0.0
    %1006 = vmatpush1.msra.mxu0 %v982
    %1007 = vmatprep.subr.mxu0 0.0
    %1008 = vmatpush1.msra.mxu0 %v983
    %1009 = vmatprep.subr.mxu0 0.0
    %1010 = vmatpush1.msra.mxu0 %v984
    %1011 = vmatprep.subr.mxu0 0.0
    %1012 = vmatpush1.msra.mxu0 %v985
    %1013 = vmatprep.subr.mxu0 0.0
    %1014 = vmatpush1.msra.mxu0 %v986
    %1015 = vmatprep.subr.mxu0 0.0
    %1016 = vmatpush1.msra.mxu0 %v987
    %1017 = vmatprep.subr.mxu0 0.0
    %1018 = vmatpush1.msra.mxu0 %v988
    %1019 = vmatprep.subr.mxu0 0.0
    %1020 = vmatpush1.msra.mxu0 %v989
    %1021 = vmatprep.subr.mxu0 0.0
    %1022 = vmatpush1.msra.mxu0 %v990
    %1023 = vmatprep.subr.mxu0 0.0
    %1024 = vmatpush1.msra.mxu0 %v991
    %1025 = vmatprep.subr.mxu0 0.0
    %1026 = vmatpush1.msra.mxu0 %v992
    %1027 = vmatprep.subr.mxu0 0.0
    %1028 = vmatpush1.msra.mxu0 0.0
    %1029 = vmatprep.subr.mxu0 0.0
    %1030 = vmatpush1.msra.mxu0 0.0
    %1031 = vmatprep.subr.mxu0 0.0
    %1032 = vmatpush1.msra.mxu0 0.0
    %1033 = vmatprep.subr.mxu0 0.0
    %1034 = vmatpush1.msra.mxu0 0.0
    %1035 = vmatprep.subr.mxu0 0.0
    %1036 = vmatpush1.msra.mxu0 0.0
    %1037 = vmatprep.subr.mxu0 0.0
    %1038 = vmatpush1.msra.mxu0 0.0
    %1039 = vmatprep.subr.mxu0 0.0
    %1040 = vmatpush1.msra.mxu0 0.0
    %1041 = vmatprep.subr.mxu0 0.0
    %1042 = vmatpush1.msra.mxu0 0.0
    %1043 = vmatprep.subr.mxu0 0.0
    %1044 = vmatpush1.msra.mxu0 0.0
    %1045 = vmatprep.subr.mxu0 0.0
    %1046 = vmatpush1.msra.mxu0 0.0
    %1047 = vmatprep.subr.mxu0 0.0
    %1048 = vmatpush1.msra.mxu0 0.0
    %1049 = vmatprep.subr.mxu0 0.0
    %1050 = vmatpush1.msra.mxu0 0.0
    %1051 = vmatprep.subr.mxu0 0.0
    %1052 = vmatpush1.msra.mxu0 0.0
    %1053 = vmatprep.subr.mxu0 0.0
    %1054 = vmatpush1.msra.mxu0 0.0
    %1055 = vmatprep.subr.mxu0 0.0
    %1056 = vmatpush1.msra.mxu0 0.0
    %1057 = vmatprep.subr.mxu0 0.0
    %1058 = vmatpush1.msra.mxu0 0.0
    %1059 = vmatprep.mubr.f32.mxu0 0.0
    %1060 = vmatmul.mubr.f32.gmra.mrb[0].mxu0 %v993
    %v1061 = vpop.f32.mrb[0].mxu0
    %v1062 = vadd.f32 0.0, %v1061
    %v1063 = vpop.f32.mrb[0].mxu0
    %1064 = vmatprep.mubr.f32.mxu0 0.0
    %1065 = vmatmul.mubr.f32.gmra.mrb[0].mxu0 %v994
    %v1066 = vpop.f32.mrb[0].mxu0
    %v1067 = vadd.f32 0.0, %v1066
    %v1068 = vpop.f32.mrb[0].mxu0
    %1069 = vdwg.mxu0
    %v1070 = vadd.f32 %v88, %v1062
    %v1071 = vadd.f32 %v88, %v1067
    %v1072 = vld [vmem:[%s974] sm:$0xff]
    %v1073 = vld [vmem:[%s974 + $0x8] sm:$0xff]
    %1074 = vmatprep.subr.mxu0 0.0
    %1075 = vmatpush1.msra.mxu0 %v977
    %1076 = vmatprep.subr.mxu0 0.0
    %1077 = vmatpush1.msra.mxu0 %v978
    %1078 = vmatprep.subr.mxu0 0.0
    %1079 = vmatpush1.msra.mxu0 %v979
    %1080 = vmatprep.subr.mxu0 0.0
    %1081 = vmatpush1.msra.mxu0 %v980
    %1082 = vmatprep.subr.mxu0 0.0
    %1083 = vmatpush1.msra.mxu0 %v981
    %1084 = vmatprep.subr.mxu0 0.0
    %1085 = vmatpush1.msra.mxu0 %v982
    %1086 = vmatprep.subr.mxu0 0.0
    %1087 = vmatpush1.msra.mxu0 %v983
    %1088 = vmatprep.subr.mxu0 0.0
    %1089 = vmatpush1.msra.mxu0 %v984
    %1090 = vmatprep.subr.mxu0 0.0
    %1091 = vmatpush1.msra.mxu0 %v985
    %1092 = vmatprep.subr.mxu0 0.0
    %1093 = vmatpush1.msra.mxu0 %v986
    %1094 = vmatprep.subr.mxu0 0.0
    %1095 = vmatpush1.msra.mxu0 %v987
    %1096 = vmatprep.subr.mxu0 0.0
    %1097 = vmatpush1.msra.mxu0 %v988
    %1098 = vmatprep.subr.mxu0 0.0
    %1099 = vmatpush1.msra.mxu0 %v989
    %1100 = vmatprep.subr.mxu0 0.0
    %1101 = vmatpush1.msra.mxu0 %v990
    %1102 = vmatprep.subr.mxu0 0.0
    %1103 = vmatpush1.msra.mxu0 %v991
    %1104 = vmatprep.subr.mxu0 0.0
    %1105 = vmatpush1.msra.mxu0 %v992
    %1106 = vmatprep.subr.mxu0 0.0
    %1107 = vmatpush1.msra.mxu0 0.0
    %1108 = vmatprep.subr.mxu0 0.0
    %1109 = vmatpush1.msra.mxu0 0.0
    %1110 = vmatprep.subr.mxu0 0.0
    %1111 = vmatpush1.msra.mxu0 0.0
    %1112 = vmatprep.subr.mxu0 0.0
    %1113 = vmatpush1.msra.mxu0 0.0
    %1114 = vmatprep.subr.mxu0 0.0
    %1115 = vmatpush1.msra.mxu0 0.0
    %1116 = vmatprep.subr.mxu0 0.0
    %1117 = vmatpush1.msra.mxu0 0.0
    %1118 = vmatprep.subr.mxu0 0.0
    %1119 = vmatpush1.msra.mxu0 0.0
    %1120 = vmatprep.subr.mxu0 0.0
    %1121 = vmatpush1.msra.mxu0 0.0
    %1122 = vmatprep.subr.mxu0 0.0
    %1123 = vmatpush1.msra.mxu0 0.0
    %1124 = vmatprep.subr.mxu0 0.0
    %1125 = vmatpush1.msra.mxu0 0.0
    %1126 = vmatprep.subr.mxu0 0.0
    %1127 = vmatpush1.msra.mxu0 0.0
    %1128 = vmatprep.subr.mxu0 0.0
    %1129 = vmatpush1.msra.mxu0 0.0
    %1130 = vmatprep.subr.mxu0 0.0
    %1131 = vmatpush1.msra.mxu0 0.0
    %1132 = vmatprep.subr.mxu0 0.0
    %1133 = vmatpush1.msra.mxu0 0.0
    %1134 = vmatprep.subr.mxu0 0.0
    %1135 = vmatpush1.msra.mxu0 0.0
    %1136 = vmatprep.subr.mxu0 0.0
    %1137 = vmatpush1.msra.mxu0 0.0
    %1138 = vmatprep.mubr.f32.mxu0 0.0
    %1139 = vmatmul.mubr.f32.gmra.mrb[0].mxu0 %v1072
    %v1140 = vpop.f32.mrb[0].mxu0
    %v1141 = vadd.f32 0.0, %v1140
    %v1142 = vpop.f32.mrb[0].mxu0
    %1143 = vmatprep.mubr.f32.mxu0 0.0
    %1144 = vmatmul.mubr.f32.gmra.mrb[0].mxu0 %v1073
    %v1145 = vpop.f32.mrb[0].mxu0
    %v1146 = vadd.f32 0.0, %v1145
    %v1147 = vpop.f32.mrb[0].mxu0
    %1148 = vdwg.mxu0
    %v1149 = vadd.f32 %v88, %v1141
    %v1150 = vadd.f32 %v88, %v1146
    %s1151 = scalar_lea.vmem [#allocation6], 128
    %v1152 = vld [vmem:[%s1151] sm:$0xff]
    %v1153 = vld [vmem:[%s1151 + $0x8] sm:$0xff]
    %v1154 = vld [vmem:[%s1151 + $0x10] sm:$0xff]
    %v1155 = vld [vmem:[%s1151 + $0x18] sm:$0xff]
    %v1156 = vld [vmem:[%s1151 + $0x20] sm:$0xff]
    %v1157 = vld [vmem:[%s1151 + $0x28] sm:$0xff]
    %v1158 = vld [vmem:[%s1151 + $0x30] sm:$0xff]
    %v1159 = vld [vmem:[%s1151 + $0x38] sm:$0xff]
    %v1160 = vld [vmem:[%s1151 + $0x40] sm:$0xff]
    %v1161 = vld [vmem:[%s1151 + $0x48] sm:$0xff]
    %v1162 = vld [vmem:[%s1151 + $0x50] sm:$0xff]
    %v1163 = vld [vmem:[%s1151 + $0x58] sm:$0xff]
    %v1164 = vld [vmem:[%s1151 + $0x60] sm:$0xff]
    %v1165 = vld [vmem:[%s1151 + $0x68] sm:$0xff]
    %v1166 = vld [vmem:[%s1151 + $0x70] sm:$0xff]
    %v1167 = vld [vmem:[%s1151 + $0x78] sm:$0xff]
    %v1168 = vld [vmem:[#allocation2 + $0x3] sm:$0xff]
    %v1169 = vld [vmem:[#allocation2 + $0xb] sm:$0xff]
    %1170 = vmatprep.subr.mxu0 0.0
    %1171 = vmatpush1.msra.mxu0 %v1152
    %1172 = vmatprep.subr.mxu0 0.0
    %1173 = vmatpush1.msra.mxu0 %v1153
    %1174 = vmatprep.subr.mxu0 0.0
    %1175 = vmatpush1.msra.mxu0 %v1154
    %1176 = vmatprep.subr.mxu0 0.0
    %1177 = vmatpush1.msra.mxu0 %v1155
    %1178 = vmatprep.subr.mxu0 0.0
    %1179 = vmatpush1.msra.mxu0 %v1156
    %1180 = vmatprep.subr.mxu0 0.0
    %1181 = vmatpush1.msra.mxu0 %v1157
    %1182 = vmatprep.subr.mxu0 0.0
    %1183 = vmatpush1.msra.mxu0 %v1158
    %1184 = vmatprep.subr.mxu0 0.0
    %1185 = vmatpush1.msra.mxu0 %v1159
    %1186 = vmatprep.subr.mxu0 0.0
    %1187 = vmatpush1.msra.mxu0 %v1160
    %1188 = vmatprep.subr.mxu0 0.0
    %1189 = vmatpush1.msra.mxu0 %v1161
    %1190 = vmatprep.subr.mxu0 0.0
    %1191 = vmatpush1.msra.mxu0 %v1162
    %1192 = vmatprep.subr.mxu0 0.0
    %1193 = vmatpush1.msra.mxu0 %v1163
    %1194 = vmatprep.subr.mxu0 0.0
    %1195 = vmatpush1.msra.mxu0 %v1164
    %1196 = vmatprep.subr.mxu0 0.0
    %1197 = vmatpush1.msra.mxu0 %v1165
    %1198 = vmatprep.subr.mxu0 0.0
    %1199 = vmatpush1.msra.mxu0 %v1166
    %1200 = vmatprep.subr.mxu0 0.0
    %1201 = vmatpush1.msra.mxu0 %v1167
    %1202 = vmatprep.subr.mxu0 0.0
    %1203 = vmatpush1.msra.mxu0 0.0
    %1204 = vmatprep.subr.mxu0 0.0
    %1205 = vmatpush1.msra.mxu0 0.0
    %1206 = vmatprep.subr.mxu0 0.0
    %1207 = vmatpush1.msra.mxu0 0.0
    %1208 = vmatprep.subr.mxu0 0.0
    %1209 = vmatpush1.msra.mxu0 0.0
    %1210 = vmatprep.subr.mxu0 0.0
    %1211 = vmatpush1.msra.mxu0 0.0
    %1212 = vmatprep.subr.mxu0 0.0
    %1213 = vmatpush1.msra.mxu0 0.0
    %1214 = vmatprep.subr.mxu0 0.0
    %1215 = vmatpush1.msra.mxu0 0.0
    %1216 = vmatprep.subr.mxu0 0.0
    %1217 = vmatpush1.msra.mxu0 0.0
    %1218 = vmatprep.subr.mxu0 0.0
    %1219 = vmatpush1.msra.mxu0 0.0
    %1220 = vmatprep.subr.mxu0 0.0
    %1221 = vmatpush1.msra.mxu0 0.0
    %1222 = vmatprep.subr.mxu0 0.0
    %1223 = vmatpush1.msra.mxu0 0.0
    %1224 = vmatprep.subr.mxu0 0.0
    %1225 = vmatpush1.msra.mxu0 0.0
    %1226 = vmatprep.subr.mxu0 0.0
    %1227 = vmatpush1.msra.mxu0 0.0
    %1228 = vmatprep.subr.mxu0 0.0
    %1229 = vmatpush1.msra.mxu0 0.0
    %1230 = vmatprep.subr.mxu0 0.0
    %1231 = vmatpush1.msra.mxu0 0.0
    %1232 = vmatprep.subr.mxu0 0.0
    %1233 = vmatpush1.msra.mxu0 0.0
    %1234 = vmatprep.mubr.f32.mxu0 0.0
    %1235 = vmatmul.mubr.f32.gmra.mrb[0].mxu0 %v1168
    %v1236 = vpop.f32.mrb[0].mxu0
    %v1237 = vadd.f32 0.0, %v1236
    %v1238 = vpop.f32.mrb[0].mxu0
    %1239 = vmatprep.mubr.f32.mxu0 0.0
    %1240 = vmatmul.mubr.f32.gmra.mrb[0].mxu0 %v1169
    %v1241 = vpop.f32.mrb[0].mxu0
    %v1242 = vadd.f32 0.0, %v1241
    %v1243 = vpop.f32.mrb[0].mxu0
    %1244 = vdwg.mxu0
    %v1245 = vadd.f32 %v1070, %v1237
    %v1246 = vadd.f32 %v1071, %v1242
    %v1247 = vld [vmem:[%s974 + $0x3] sm:$0xff]
    %v1248 = vld [vmem:[%s974 + $0xb] sm:$0xff]
    %1249 = vmatprep.subr.mxu0 0.0
    %1250 = vmatpush1.msra.mxu0 %v1152
    %1251 = vmatprep.subr.mxu0 0.0
    %1252 = vmatpush1.msra.mxu0 %v1153
    %1253 = vmatprep.subr.mxu0 0.0
    %1254 = vmatpush1.msra.mxu0 %v1154
    %1255 = vmatprep.subr.mxu0 0.0
    %1256 = vmatpush1.msra.mxu0 %v1155
    %1257 = vmatprep.subr.mxu0 0.0
    %1258 = vmatpush1.msra.mxu0 %v1156
    %1259 = vmatprep.subr.mxu0 0.0
    %1260 = vmatpush1.msra.mxu0 %v1157
    %1261 = vmatprep.subr.mxu0 0.0
    %1262 = vmatpush1.msra.mxu0 %v1158
    %1263 = vmatprep.subr.mxu0 0.0
    %1264 = vmatpush1.msra.mxu0 %v1159
    %1265 = vmatprep.subr.mxu0 0.0
    %1266 = vmatpush1.msra.mxu0 %v1160
    %1267 = vmatprep.subr.mxu0 0.0
    %1268 = vmatpush1.msra.mxu0 %v1161
    %1269 = vmatprep.subr.mxu0 0.0
    %1270 = vmatpush1.msra.mxu0 %v1162
    %1271 = vmatprep.subr.mxu0 0.0
    %1272 = vmatpush1.msra.mxu0 %v1163
    %1273 = vmatprep.subr.mxu0 0.0
    %1274 = vmatpush1.msra.mxu0 %v1164
    %1275 = vmatprep.subr.mxu0 0.0
    %1276 = vmatpush1.msra.mxu0 %v1165
    %1277 = vmatprep.subr.mxu0 0.0
    %1278 = vmatpush1.msra.mxu0 %v1166
    %1279 = vmatprep.subr.mxu0 0.0
    %1280 = vmatpush1.msra.mxu0 %v1167
    %1281 = vmatprep.subr.mxu0 0.0
    %1282 = vmatpush1.msra.mxu0 0.0
    %1283 = vmatprep.subr.mxu0 0.0
    %1284 = vmatpush1.msra.mxu0 0.0
    %1285 = vmatprep.subr.mxu0 0.0
    %1286 = vmatpush1.msra.mxu0 0.0
    %1287 = vmatprep.subr.mxu0 0.0
    %1288 = vmatpush1.msra.mxu0 0.0
    %1289 = vmatprep.subr.mxu0 0.0
    %1290 = vmatpush1.msra.mxu0 0.0
    %1291 = vmatprep.subr.mxu0 0.0
    %1292 = vmatpush1.msra.mxu0 0.0
    %1293 = vmatprep.subr.mxu0 0.0
    %1294 = vmatpush1.msra.mxu0 0.0
    %1295 = vmatprep.subr.mxu0 0.0
    %1296 = vmatpush1.msra.mxu0 0.0
    %1297 = vmatprep.subr.mxu0 0.0
    %1298 = vmatpush1.msra.mxu0 0.0
    %1299 = vmatprep.subr.mxu0 0.0
    %1300 = vmatpush1.msra.mxu0 0.0
    %1301 = vmatprep.subr.mxu0 0.0
    %1302 = vmatpush1.msra.mxu0 0.0
    %1303 = vmatprep.subr.mxu0 0.0
    %1304 = vmatpush1.msra.mxu0 0.0
    %1305 = vmatprep.subr.mxu0 0.0
    %1306 = vmatpush1.msra.mxu0 0.0
    %1307 = vmatprep.subr.mxu0 0.0
    %1308 = vmatpush1.msra.mxu0 0.0
    %1309 = vmatprep.subr.mxu0 0.0
    %1310 = vmatpush1.msra.mxu0 0.0
    %1311 = vmatprep.subr.mxu0 0.0
    %1312 = vmatpush1.msra.mxu0 0.0
    %1313 = vmatprep.mubr.f32.mxu0 0.0
    %1314 = vmatmul.mubr.f32.gmra.mrb[0].mxu0 %v1247
    %v1315 = vpop.f32.mrb[0].mxu0
    %v1316 = vadd.f32 0.0, %v1315
    %v1317 = vpop.f32.mrb[0].mxu0
    %1318 = vmatprep.mubr.f32.mxu0 0.0
    %1319 = vmatmul.mubr.f32.gmra.mrb[0].mxu0 %v1248
    %v1320 = vpop.f32.mrb[0].mxu0
    %v1321 = vadd.f32 0.0, %v1320
    %v1322 = vpop.f32.mrb[0].mxu0
    %1323 = vdwg.mxu0
    %v1324 = vadd.f32 %v1149, %v1316
    %v1325 = vadd.f32 %v1150, %v1321
    %s1326 = scalar_lea.vmem [#allocation6], 256
    %v1327 = vld [vmem:[%s1326] sm:$0xff]
    %v1328 = vld [vmem:[%s1326 + $0x8] sm:$0xff]
    %v1329 = vld [vmem:[%s1326 + $0x10] sm:$0xff]
    %v1330 = vld [vmem:[%s1326 + $0x18] sm:$0xff]
    %v1331 = vld [vmem:[%s1326 + $0x20] sm:$0xff]
    %v1332 = vld [vmem:[%s1326 + $0x28] sm:$0xff]
    %v1333 = vld [vmem:[%s1326 + $0x30] sm:$0xff]
    %v1334 = vld [vmem:[%s1326 + $0x38] sm:$0xff]
    %v1335 = vld [vmem:[%s1326 + $0x40] sm:$0xff]
    %v1336 = vld [vmem:[%s1326 + $0x48] sm:$0xff]
    %v1337 = vld [vmem:[%s1326 + $0x50] sm:$0xff]
    %v1338 = vld [vmem:[%s1326 + $0x58] sm:$0xff]
    %v1339 = vld [vmem:[%s1326 + $0x60] sm:$0xff]
    %v1340 = vld [vmem:[%s1326 + $0x68] sm:$0xff]
    %v1341 = vld [vmem:[%s1326 + $0x70] sm:$0xff]
    %v1342 = vld [vmem:[%s1326 + $0x78] sm:$0xff]
    %v1343 = vld [vmem:[#allocation2 + $0x6] sm:$0xff]
    %v1344 = vld [vmem:[#allocation2 + $0xe] sm:$0xff]
    %1345 = vmatprep.subr.mxu0 0.0
    %1346 = vmatpush1.msra.mxu0 %v1327
    %1347 = vmatprep.subr.mxu0 0.0
    %1348 = vmatpush1.msra.mxu0 %v1328
    %1349 = vmatprep.subr.mxu0 0.0
    %1350 = vmatpush1.msra.mxu0 %v1329
    %1351 = vmatprep.subr.mxu0 0.0
    %1352 = vmatpush1.msra.mxu0 %v1330
    %1353 = vmatprep.subr.mxu0 0.0
    %1354 = vmatpush1.msra.mxu0 %v1331
    %1355 = vmatprep.subr.mxu0 0.0
    %1356 = vmatpush1.msra.mxu0 %v1332
    %1357 = vmatprep.subr.mxu0 0.0
    %1358 = vmatpush1.msra.mxu0 %v1333
    %1359 = vmatprep.subr.mxu0 0.0
    %1360 = vmatpush1.msra.mxu0 %v1334
    %1361 = vmatprep.subr.mxu0 0.0
    %1362 = vmatpush1.msra.mxu0 %v1335
    %1363 = vmatprep.subr.mxu0 0.0
    %1364 = vmatpush1.msra.mxu0 %v1336
    %1365 = vmatprep.subr.mxu0 0.0
    %1366 = vmatpush1.msra.mxu0 %v1337
    %1367 = vmatprep.subr.mxu0 0.0
    %1368 = vmatpush1.msra.mxu0 %v1338
    %1369 = vmatprep.subr.mxu0 0.0
    %1370 = vmatpush1.msra.mxu0 %v1339
    %1371 = vmatprep.subr.mxu0 0.0
    %1372 = vmatpush1.msra.mxu0 %v1340
    %1373 = vmatprep.subr.mxu0 0.0
    %1374 = vmatpush1.msra.mxu0 %v1341
    %1375 = vmatprep.subr.mxu0 0.0
    %1376 = vmatpush1.msra.mxu0 %v1342
    %1377 = vmatprep.subr.mxu0 0.0
    %1378 = vmatpush1.msra.mxu0 0.0
    %1379 = vmatprep.subr.mxu0 0.0
    %1380 = vmatpush1.msra.mxu0 0.0
    %1381 = vmatprep.subr.mxu0 0.0
    %1382 = vmatpush1.msra.mxu0 0.0
    %1383 = vmatprep.subr.mxu0 0.0
    %1384 = vmatpush1.msra.mxu0 0.0
    %1385 = vmatprep.subr.mxu0 0.0
    %1386 = vmatpush1.msra.mxu0 0.0
    %1387 = vmatprep.subr.mxu0 0.0
    %1388 = vmatpush1.msra.mxu0 0.0
    %1389 = vmatprep.subr.mxu0 0.0
    %1390 = vmatpush1.msra.mxu0 0.0
    %1391 = vmatprep.subr.mxu0 0.0
    %1392 = vmatpush1.msra.mxu0 0.0
    %1393 = vmatprep.subr.mxu0 0.0
    %1394 = vmatpush1.msra.mxu0 0.0
    %1395 = vmatprep.subr.mxu0 0.0
    %1396 = vmatpush1.msra.mxu0 0.0
    %1397 = vmatprep.subr.mxu0 0.0
    %1398 = vmatpush1.msra.mxu0 0.0
    %1399 = vmatprep.subr.mxu0 0.0
    %1400 = vmatpush1.msra.mxu0 0.0
    %1401 = vmatprep.subr.mxu0 0.0
    %1402 = vmatpush1.msra.mxu0 0.0
    %1403 = vmatprep.subr.mxu0 0.0
    %1404 = vmatpush1.msra.mxu0 0.0
    %1405 = vmatprep.subr.mxu0 0.0
    %1406 = vmatpush1.msra.mxu0 0.0
    %1407 = vmatprep.subr.mxu0 0.0
    %1408 = vmatpush1.msra.mxu0 0.0
    %1409 = vmatprep.mubr.f32.mxu0 0.0
    %1410 = vmatmul.mubr.f32.gmra.mrb[0].mxu0 %v1343
    %v1411 = vpop.f32.mrb[0].mxu0
    %v1412 = vadd.f32 0.0, %v1411
    %v1413 = vpop.f32.mrb[0].mxu0
    %1414 = vmatprep.mubr.f32.mxu0 0.0
    %1415 = vmatmul.mubr.f32.gmra.mrb[0].mxu0 %v1344
    %v1416 = vpop.f32.mrb[0].mxu0
    %v1417 = vadd.f32 0.0, %v1416
    %v1418 = vpop.f32.mrb[0].mxu0
    %1419 = vdwg.mxu0
    %v1420 = vadd.f32 %v1245, %v1412
    %v1421 = vadd.f32 %v1246, %v1417
    %v1422 = vld [vmem:[%s974 + $0x6] sm:$0xff]
    %v1423 = vld [vmem:[%s974 + $0xe] sm:$0xff]
    %1424 = vmatprep.subr.mxu0 0.0
    %1425 = vmatpush1.msra.mxu0 %v1327
    %1426 = vmatprep.subr.mxu0 0.0
    %1427 = vmatpush1.msra.mxu0 %v1328
    %1428 = vmatprep.subr.mxu0 0.0
    %1429 = vmatpush1.msra.mxu0 %v1329
    %1430 = vmatprep.subr.mxu0 0.0
    %1431 = vmatpush1.msra.mxu0 %v1330
    %1432 = vmatprep.subr.mxu0 0.0
    %1433 = vmatpush1.msra.mxu0 %v1331
    %1434 = vmatprep.subr.mxu0 0.0
    %1435 = vmatpush1.msra.mxu0 %v1332
    %1436 = vmatprep.subr.mxu0 0.0
    %1437 = vmatpush1.msra.mxu0 %v1333
    %1438 = vmatprep.subr.mxu0 0.0
    %1439 = vmatpush1.msra.mxu0 %v1334
    %1440 = vmatprep.subr.mxu0 0.0
    %1441 = vmatpush1.msra.mxu0 %v1335
    %1442 = vmatprep.subr.mxu0 0.0
    %1443 = vmatpush1.msra.mxu0 %v1336
    %1444 = vmatprep.subr.mxu0 0.0
    %1445 = vmatpush1.msra.mxu0 %v1337
    %1446 = vmatprep.subr.mxu0 0.0
    %1447 = vmatpush1.msra.mxu0 %v1338
    %1448 = vmatprep.subr.mxu0 0.0
    %1449 = vmatpush1.msra.mxu0 %v1339
    %1450 = vmatprep.subr.mxu0 0.0
    %1451 = vmatpush1.msra.mxu0 %v1340
    %1452 = vmatprep.subr.mxu0 0.0
    %1453 = vmatpush1.msra.mxu0 %v1341
    %1454 = vmatprep.subr.mxu0 0.0
    %1455 = vmatpush1.msra.mxu0 %v1342
    %1456 = vmatprep.subr.mxu0 0.0
    %1457 = vmatpush1.msra.mxu0 0.0
    %1458 = vmatprep.subr.mxu0 0.0
    %1459 = vmatpush1.msra.mxu0 0.0
    %1460 = vmatprep.subr.mxu0 0.0
    %1461 = vmatpush1.msra.mxu0 0.0
    %1462 = vmatprep.subr.mxu0 0.0
    %1463 = vmatpush1.msra.mxu0 0.0
    %1464 = vmatprep.subr.mxu0 0.0
    %1465 = vmatpush1.msra.mxu0 0.0
    %1466 = vmatprep.subr.mxu0 0.0
    %1467 = vmatpush1.msra.mxu0 0.0
    %1468 = vmatprep.subr.mxu0 0.0
    %1469 = vmatpush1.msra.mxu0 0.0
    %1470 = vmatprep.subr.mxu0 0.0
    %1471 = vmatpush1.msra.mxu0 0.0
    %1472 = vmatprep.subr.mxu0 0.0
    %1473 = vmatpush1.msra.mxu0 0.0
    %1474 = vmatprep.subr.mxu0 0.0
    %1475 = vmatpush1.msra.mxu0 0.0
    %1476 = vmatprep.subr.mxu0 0.0
    %1477 = vmatpush1.msra.mxu0 0.0
    %1478 = vmatprep.subr.mxu0 0.0
    %1479 = vmatpush1.msra.mxu0 0.0
    %1480 = vmatprep.subr.mxu0 0.0
    %1481 = vmatpush1.msra.mxu0 0.0
    %1482 = vmatprep.subr.mxu0 0.0
    %1483 = vmatpush1.msra.mxu0 0.0
    %1484 = vmatprep.subr.mxu0 0.0
    %1485 = vmatpush1.msra.mxu0 0.0
    %1486 = vmatprep.subr.mxu0 0.0
    %1487 = vmatpush1.msra.mxu0 0.0
    %1488 = vmatprep.mubr.f32.mxu0 0.0
    %1489 = vmatmul.mubr.f32.gmra.mrb[0].mxu0 %v1422
    %v1490 = vpop.f32.mrb[0].mxu0
    %v1491 = vadd.f32 0.0, %v1490
    %v1492 = vpop.f32.mrb[0].mxu0
    %1493 = vmatprep.mubr.f32.mxu0 0.0
    %1494 = vmatmul.mubr.f32.gmra.mrb[0].mxu0 %v1423
    %v1495 = vpop.f32.mrb[0].mxu0
    %v1496 = vadd.f32 0.0, %v1495
    %v1497 = vpop.f32.mrb[0].mxu0
    %1498 = vdwg.mxu0
    %v1499 = vadd.f32 %v1324, %v1491
    %v1500 = vadd.f32 %v1325, %v1496
    %s1501 = scalar_lea.vmem [#allocation6], 384
    %v1502 = vld [vmem:[%s1501] sm:$0xff]
    %v1503 = vld [vmem:[%s1501 + $0x8] sm:$0xff]
    %v1504 = vld [vmem:[%s1501 + $0x10] sm:$0xff]
    %v1505 = vld [vmem:[%s1501 + $0x18] sm:$0xff]
    %v1506 = vld [vmem:[%s1501 + $0x20] sm:$0xff]
    %v1507 = vld [vmem:[%s1501 + $0x28] sm:$0xff]
    %v1508 = vld [vmem:[%s1501 + $0x30] sm:$0xff]
    %v1509 = vld [vmem:[%s1501 + $0x38] sm:$0xff]
    %v1510 = vld [vmem:[%s1501 + $0x40] sm:$0xff]
    %v1511 = vld [vmem:[%s1501 + $0x48] sm:$0xff]
    %v1512 = vld [vmem:[%s1501 + $0x50] sm:$0xff]
    %v1513 = vld [vmem:[%s1501 + $0x58] sm:$0xff]
    %v1514 = vld [vmem:[%s1501 + $0x60] sm:$0xff]
    %v1515 = vld [vmem:[%s1501 + $0x68] sm:$0xff]
    %v1516 = vld [vmem:[%s1501 + $0x70] sm:$0xff]
    %v1517 = vld [vmem:[%s1501 + $0x78] sm:$0xff]
    %v1518 = vld [vmem:[#allocation2 + $0x9] sm:$0xff]
    %v1519 = vld [vmem:[#allocation2 + $0x11] sm:$0xff]
    %1520 = vmatprep.subr.mxu0 0.0
    %1521 = vmatpush1.msra.mxu0 %v1502
    %1522 = vmatprep.subr.mxu0 0.0
    %1523 = vmatpush1.msra.mxu0 %v1503
    %1524 = vmatprep.subr.mxu0 0.0
    %1525 = vmatpush1.msra.mxu0 %v1504
    %1526 = vmatprep.subr.mxu0 0.0
    %1527 = vmatpush1.msra.mxu0 %v1505
    %1528 = vmatprep.subr.mxu0 0.0
    %1529 = vmatpush1.msra.mxu0 %v1506
    %1530 = vmatprep.subr.mxu0 0.0
    %1531 = vmatpush1.msra.mxu0 %v1507
    %1532 = vmatprep.subr.mxu0 0.0
    %1533 = vmatpush1.msra.mxu0 %v1508
    %1534 = vmatprep.subr.mxu0 0.0
    %1535 = vmatpush1.msra.mxu0 %v1509
    %1536 = vmatprep.subr.mxu0 0.0
    %1537 = vmatpush1.msra.mxu0 %v1510
    %1538 = vmatprep.subr.mxu0 0.0
    %1539 = vmatpush1.msra.mxu0 %v1511
    %1540 = vmatprep.subr.mxu0 0.0
    %1541 = vmatpush1.msra.mxu0 %v1512
    %1542 = vmatprep.subr.mxu0 0.0
    %1543 = vmatpush1.msra.mxu0 %v1513
    %1544 = vmatprep.subr.mxu0 0.0
    %1545 = vmatpush1.msra.mxu0 %v1514
    %1546 = vmatprep.subr.mxu0 0.0
    %1547 = vmatpush1.msra.mxu0 %v1515
    %1548 = vmatprep.subr.mxu0 0.0
    %1549 = vmatpush1.msra.mxu0 %v1516
    %1550 = vmatprep.subr.mxu0 0.0
    %1551 = vmatpush1.msra.mxu0 %v1517
    %1552 = vmatprep.subr.mxu0 0.0
    %1553 = vmatpush1.msra.mxu0 0.0
    %1554 = vmatprep.subr.mxu0 0.0
    %1555 = vmatpush1.msra.mxu0 0.0
    %1556 = vmatprep.subr.mxu0 0.0
    %1557 = vmatpush1.msra.mxu0 0.0
    %1558 = vmatprep.subr.mxu0 0.0
    %1559 = vmatpush1.msra.mxu0 0.0
    %1560 = vmatprep.subr.mxu0 0.0
    %1561 = vmatpush1.msra.mxu0 0.0
    %1562 = vmatprep.subr.mxu0 0.0
    %1563 = vmatpush1.msra.mxu0 0.0
    %1564 = vmatprep.subr.mxu0 0.0
    %1565 = vmatpush1.msra.mxu0 0.0
    %1566 = vmatprep.subr.mxu0 0.0
    %1567 = vmatpush1.msra.mxu0 0.0
    %1568 = vmatprep.subr.mxu0 0.0
    %1569 = vmatpush1.msra.mxu0 0.0
    %1570 = vmatprep.subr.mxu0 0.0
    %1571 = vmatpush1.msra.mxu0 0.0
    %1572 = vmatprep.subr.mxu0 0.0
    %1573 = vmatpush1.msra.mxu0 0.0
    %1574 = vmatprep.subr.mxu0 0.0
    %1575 = vmatpush1.msra.mxu0 0.0
    %1576 = vmatprep.subr.mxu0 0.0
    %1577 = vmatpush1.msra.mxu0 0.0
    %1578 = vmatprep.subr.mxu0 0.0
    %1579 = vmatpush1.msra.mxu0 0.0
    %1580 = vmatprep.subr.mxu0 0.0
    %1581 = vmatpush1.msra.mxu0 0.0
    %1582 = vmatprep.subr.mxu0 0.0
    %1583 = vmatpush1.msra.mxu0 0.0
    %1584 = vmatprep.mubr.f32.mxu0 0.0
    %1585 = vmatmul.mubr.f32.gmra.mrb[0].mxu0 %v1518
    %v1586 = vpop.f32.mrb[0].mxu0
    %v1587 = vadd.f32 0.0, %v1586
    %v1588 = vpop.f32.mrb[0].mxu0
    %1589 = vmatprep.mubr.f32.mxu0 0.0
    %1590 = vmatmul.mubr.f32.gmra.mrb[0].mxu0 %v1519
    %v1591 = vpop.f32.mrb[0].mxu0
    %v1592 = vadd.f32 0.0, %v1591
    %v1593 = vpop.f32.mrb[0].mxu0
    %1594 = vdwg.mxu0
    %v1595 = vadd.f32 %v1420, %v1587
    %v1596 = vadd.f32 %v1421, %v1592
    %v1597 = vld [vmem:[%s974 + $0x9] sm:$0xff]
    %v1598 = vld [vmem:[%s974 + $0x11] sm:$0xff]
    %1599 = vmatprep.subr.mxu0 0.0
    %1600 = vmatpush1.msra.mxu0 %v1502
    %1601 = vmatprep.subr.mxu0 0.0
    %1602 = vmatpush1.msra.mxu0 %v1503
    %1603 = vmatprep.subr.mxu0 0.0
    %1604 = vmatpush1.msra.mxu0 %v1504
    %1605 = vmatprep.subr.mxu0 0.0
    %1606 = vmatpush1.msra.mxu0 %v1505
    %1607 = vmatprep.subr.mxu0 0.0
    %1608 = vmatpush1.msra.mxu0 %v1506
    %1609 = vmatprep.subr.mxu0 0.0
    %1610 = vmatpush1.msra.mxu0 %v1507
    %1611 = vmatprep.subr.mxu0 0.0
    %1612 = vmatpush1.msra.mxu0 %v1508
    %1613 = vmatprep.subr.mxu0 0.0
    %1614 = vmatpush1.msra.mxu0 %v1509
    %1615 = vmatprep.subr.mxu0 0.0
    %1616 = vmatpush1.msra.mxu0 %v1510
    %1617 = vmatprep.subr.mxu0 0.0
    %1618 = vmatpush1.msra.mxu0 %v1511
    %1619 = vmatprep.subr.mxu0 0.0
    %1620 = vmatpush1.msra.mxu0 %v1512
    %1621 = vmatprep.subr.mxu0 0.0
    %1622 = vmatpush1.msra.mxu0 %v1513
    %1623 = vmatprep.subr.mxu0 0.0
    %1624 = vmatpush1.msra.mxu0 %v1514
    %1625 = vmatprep.subr.mxu0 0.0
    %1626 = vmatpush1.msra.mxu0 %v1515
    %1627 = vmatprep.subr.mxu0 0.0
    %1628 = vmatpush1.msra.mxu0 %v1516
    %1629 = vmatprep.subr.mxu0 0.0
    %1630 = vmatpush1.msra.mxu0 %v1517
    %1631 = vmatprep.subr.mxu0 0.0
    %1632 = vmatpush1.msra.mxu0 0.0
    %1633 = vmatprep.subr.mxu0 0.0
    %1634 = vmatpush1.msra.mxu0 0.0
    %1635 = vmatprep.subr.mxu0 0.0
    %1636 = vmatpush1.msra.mxu0 0.0
    %1637 = vmatprep.subr.mxu0 0.0
    %1638 = vmatpush1.msra.mxu0 0.0
    %1639 = vmatprep.subr.mxu0 0.0
    %1640 = vmatpush1.msra.mxu0 0.0
    %1641 = vmatprep.subr.mxu0 0.0
    %1642 = vmatpush1.msra.mxu0 0.0
    %1643 = vmatprep.subr.mxu0 0.0
    %1644 = vmatpush1.msra.mxu0 0.0
    %1645 = vmatprep.subr.mxu0 0.0
    %1646 = vmatpush1.msra.mxu0 0.0
    %1647 = vmatprep.subr.mxu0 0.0
    %1648 = vmatpush1.msra.mxu0 0.0
    %1649 = vmatprep.subr.mxu0 0.0
    %1650 = vmatpush1.msra.mxu0 0.0
    %1651 = vmatprep.subr.mxu0 0.0
    %1652 = vmatpush1.msra.mxu0 0.0
    %1653 = vmatprep.subr.mxu0 0.0
    %1654 = vmatpush1.msra.mxu0 0.0
    %1655 = vmatprep.subr.mxu0 0.0
    %1656 = vmatpush1.msra.mxu0 0.0
    %1657 = vmatprep.subr.mxu0 0.0
    %1658 = vmatpush1.msra.mxu0 0.0
    %1659 = vmatprep.subr.mxu0 0.0
    %1660 = vmatpush1.msra.mxu0 0.0
    %1661 = vmatprep.subr.mxu0 0.0
    %1662 = vmatpush1.msra.mxu0 0.0
    %1663 = vmatprep.mubr.f32.mxu0 0.0
    %1664 = vmatmul.mubr.f32.gmra.mrb[0].mxu0 %v1597
    %v1665 = vpop.f32.mrb[0].mxu0
    %v1666 = vadd.f32 0.0, %v1665
    %v1667 = vpop.f32.mrb[0].mxu0
    %1668 = vmatprep.mubr.f32.mxu0 0.0
    %1669 = vmatmul.mubr.f32.gmra.mrb[0].mxu0 %v1598
    %v1670 = vpop.f32.mrb[0].mxu0
    %v1671 = vadd.f32 0.0, %v1670
    %v1672 = vpop.f32.mrb[0].mxu0
    %1673 = vdwg.mxu0
    %v1674 = vadd.f32 %v1499, %v1666
    %v1675 = vadd.f32 %v1500, %v1671
    %s1676 = scalar_lea.vmem [#allocation6], 512
    %v1677 = vld [vmem:[%s1676] sm:$0xff]
    %v1678 = vld [vmem:[%s1676 + $0x8] sm:$0xff]
    %v1679 = vld [vmem:[%s1676 + $0x10] sm:$0xff]
    %v1680 = vld [vmem:[%s1676 + $0x18] sm:$0xff]
    %v1681 = vld [vmem:[%s1676 + $0x20] sm:$0xff]
    %v1682 = vld [vmem:[%s1676 + $0x28] sm:$0xff]
    %v1683 = vld [vmem:[%s1676 + $0x30] sm:$0xff]
    %v1684 = vld [vmem:[%s1676 + $0x38] sm:$0xff]
    %v1685 = vld [vmem:[%s1676 + $0x40] sm:$0xff]
    %v1686 = vld [vmem:[%s1676 + $0x48] sm:$0xff]
    %v1687 = vld [vmem:[%s1676 + $0x50] sm:$0xff]
    %v1688 = vld [vmem:[%s1676 + $0x58] sm:$0xff]
    %v1689 = vld [vmem:[%s1676 + $0x60] sm:$0xff]
    %v1690 = vld [vmem:[%s1676 + $0x68] sm:$0xff]
    %v1691 = vld [vmem:[%s1676 + $0x70] sm:$0xff]
    %v1692 = vld [vmem:[%s1676 + $0x78] sm:$0xff]
    %v1693 = vld [vmem:[#allocation2 + $0xc] sm:$0xff]
    %v1694 = vld [vmem:[#allocation2 + $0x14] sm:$0xff]
    %1695 = vmatprep.subr.mxu0 0.0
    %1696 = vmatpush1.msra.mxu0 %v1677
    %1697 = vmatprep.subr.mxu0 0.0
    %1698 = vmatpush1.msra.mxu0 %v1678
    %1699 = vmatprep.subr.mxu0 0.0
    %1700 = vmatpush1.msra.mxu0 %v1679
    %1701 = vmatprep.subr.mxu0 0.0
    %1702 = vmatpush1.msra.mxu0 %v1680
    %1703 = vmatprep.subr.mxu0 0.0
    %1704 = vmatpush1.msra.mxu0 %v1681
    %1705 = vmatprep.subr.mxu0 0.0
    %1706 = vmatpush1.msra.mxu0 %v1682
    %1707 = vmatprep.subr.mxu0 0.0
    %1708 = vmatpush1.msra.mxu0 %v1683
    %1709 = vmatprep.subr.mxu0 0.0
    %1710 = vmatpush1.msra.mxu0 %v1684
    %1711 = vmatprep.subr.mxu0 0.0
    %1712 = vmatpush1.msra.mxu0 %v1685
    %1713 = vmatprep.subr.mxu0 0.0
    %1714 = vmatpush1.msra.mxu0 %v1686
    %1715 = vmatprep.subr.mxu0 0.0
    %1716 = vmatpush1.msra.mxu0 %v1687
    %1717 = vmatprep.subr.mxu0 0.0
    %1718 = vmatpush1.msra.mxu0 %v1688
    %1719 = vmatprep.subr.mxu0 0.0
    %1720 = vmatpush1.msra.mxu0 %v1689
    %1721 = vmatprep.subr.mxu0 0.0
    %1722 = vmatpush1.msra.mxu0 %v1690
    %1723 = vmatprep.subr.mxu0 0.0
    %1724 = vmatpush1.msra.mxu0 %v1691
    %1725 = vmatprep.subr.mxu0 0.0
    %1726 = vmatpush1.msra.mxu0 %v1692
    %1727 = vmatprep.subr.mxu0 0.0
    %1728 = vmatpush1.msra.mxu0 0.0
    %1729 = vmatprep.subr.mxu0 0.0
    %1730 = vmatpush1.msra.mxu0 0.0
    %1731 = vmatprep.subr.mxu0 0.0
    %1732 = vmatpush1.msra.mxu0 0.0
    %1733 = vmatprep.subr.mxu0 0.0
    %1734 = vmatpush1.msra.mxu0 0.0
    %1735 = vmatprep.subr.mxu0 0.0
    %1736 = vmatpush1.msra.mxu0 0.0
    %1737 = vmatprep.subr.mxu0 0.0
    %1738 = vmatpush1.msra.mxu0 0.0
    %1739 = vmatprep.subr.mxu0 0.0
    %1740 = vmatpush1.msra.mxu0 0.0
    %1741 = vmatprep.subr.mxu0 0.0
    %1742 = vmatpush1.msra.mxu0 0.0
    %1743 = vmatprep.subr.mxu0 0.0
    %1744 = vmatpush1.msra.mxu0 0.0
    %1745 = vmatprep.subr.mxu0 0.0
    %1746 = vmatpush1.msra.mxu0 0.0
    %1747 = vmatprep.subr.mxu0 0.0
    %1748 = vmatpush1.msra.mxu0 0.0
    %1749 = vmatprep.subr.mxu0 0.0
    %1750 = vmatpush1.msra.mxu0 0.0
    %1751 = vmatprep.subr.mxu0 0.0
    %1752 = vmatpush1.msra.mxu0 0.0
    %1753 = vmatprep.subr.mxu0 0.0
    %1754 = vmatpush1.msra.mxu0 0.0
    %1755 = vmatprep.subr.mxu0 0.0
    %1756 = vmatpush1.msra.mxu0 0.0
    %1757 = vmatprep.subr.mxu0 0.0
    %1758 = vmatpush1.msra.mxu0 0.0
    %1759 = vmatprep.mubr.f32.mxu0 0.0
    %1760 = vmatmul.mubr.f32.gmra.mrb[0].mxu0 %v1693
    %v1761 = vpop.f32.mrb[0].mxu0
    %v1762 = vadd.f32 0.0, %v1761
    %v1763 = vpop.f32.mrb[0].mxu0
    %1764 = vmatprep.mubr.f32.mxu0 0.0
    %1765 = vmatmul.mubr.f32.gmra.mrb[0].mxu0 %v1694
    %v1766 = vpop.f32.mrb[0].mxu0
    %v1767 = vadd.f32 0.0, %v1766
    %v1768 = vpop.f32.mrb[0].mxu0
    %1769 = vdwg.mxu0
    %v1770 = vadd.f32 %v1595, %v1762
    %v1771 = vadd.f32 %v1596, %v1767
    %v1772 = vld [vmem:[%s974 + $0xc] sm:$0xff]
    %v1773 = vld [vmem:[%s974 + $0x14] sm:$0xff]
    %1774 = vmatprep.subr.mxu0 0.0
    %1775 = vmatpush1.msra.mxu0 %v1677
    %1776 = vmatprep.subr.mxu0 0.0
    %1777 = vmatpush1.msra.mxu0 %v1678
    %1778 = vmatprep.subr.mxu0 0.0
    %1779 = vmatpush1.msra.mxu0 %v1679
    %1780 = vmatprep.subr.mxu0 0.0
    %1781 = vmatpush1.msra.mxu0 %v1680
    %1782 = vmatprep.subr.mxu0 0.0
    %1783 = vmatpush1.msra.mxu0 %v1681
    %1784 = vmatprep.subr.mxu0 0.0
    %1785 = vmatpush1.msra.mxu0 %v1682
    %1786 = vmatprep.subr.mxu0 0.0
    %1787 = vmatpush1.msra.mxu0 %v1683
    %1788 = vmatprep.subr.mxu0 0.0
    %1789 = vmatpush1.msra.mxu0 %v1684
    %1790 = vmatprep.subr.mxu0 0.0
    %1791 = vmatpush1.msra.mxu0 %v1685
    %1792 = vmatprep.subr.mxu0 0.0
    %1793 = vmatpush1.msra.mxu0 %v1686
    %1794 = vmatprep.subr.mxu0 0.0
    %1795 = vmatpush1.msra.mxu0 %v1687
    %1796 = vmatprep.subr.mxu0 0.0
    %1797 = vmatpush1.msra.mxu0 %v1688
    %1798 = vmatprep.subr.mxu0 0.0
    %1799 = vmatpush1.msra.mxu0 %v1689
    %1800 = vmatprep.subr.mxu0 0.0
    %1801 = vmatpush1.msra.mxu0 %v1690
    %1802 = vmatprep.subr.mxu0 0.0
    %1803 = vmatpush1.msra.mxu0 %v1691
    %1804 = vmatprep.subr.mxu0 0.0
    %1805 = vmatpush1.msra.mxu0 %v1692
    %1806 = vmatprep.subr.mxu0 0.0
    %1807 = vmatpush1.msra.mxu0 0.0
    %1808 = vmatprep.subr.mxu0 0.0
    %1809 = vmatpush1.msra.mxu0 0.0
    %1810 = vmatprep.subr.mxu0 0.0
    %1811 = vmatpush1.msra.mxu0 0.0
    %1812 = vmatprep.subr.mxu0 0.0
    %1813 = vmatpush1.msra.mxu0 0.0
    %1814 = vmatprep.subr.mxu0 0.0
    %1815 = vmatpush1.msra.mxu0 0.0
    %1816 = vmatprep.subr.mxu0 0.0
    %1817 = vmatpush1.msra.mxu0 0.0
    %1818 = vmatprep.subr.mxu0 0.0
    %1819 = vmatpush1.msra.mxu0 0.0
    %1820 = vmatprep.subr.mxu0 0.0
    %1821 = vmatpush1.msra.mxu0 0.0
    %1822 = vmatprep.subr.mxu0 0.0
    %1823 = vmatpush1.msra.mxu0 0.0
    %1824 = vmatprep.subr.mxu0 0.0
    %1825 = vmatpush1.msra.mxu0 0.0
    %1826 = vmatprep.subr.mxu0 0.0
    %1827 = vmatpush1.msra.mxu0 0.0
    %1828 = vmatprep.subr.mxu0 0.0
    %1829 = vmatpush1.msra.mxu0 0.0
    %1830 = vmatprep.subr.mxu0 0.0
    %1831 = vmatpush1.msra.mxu0 0.0
    %1832 = vmatprep.subr.mxu0 0.0
    %1833 = vmatpush1.msra.mxu0 0.0
    %1834 = vmatprep.subr.mxu0 0.0
    %1835 = vmatpush1.msra.mxu0 0.0
    %1836 = vmatprep.subr.mxu0 0.0
    %1837 = vmatpush1.msra.mxu0 0.0
    %1838 = vmatprep.mubr.f32.mxu0 0.0
    %1839 = vmatmul.mubr.f32.gmra.mrb[0].mxu0 %v1772
    %v1840 = vpop.f32.mrb[0].mxu0
    %v1841 = vadd.f32 0.0, %v1840
    %v1842 = vpop.f32.mrb[0].mxu0
    %1843 = vmatprep.mubr.f32.mxu0 0.0
    %1844 = vmatmul.mubr.f32.gmra.mrb[0].mxu0 %v1773
    %v1845 = vpop.f32.mrb[0].mxu0
    %v1846 = vadd.f32 0.0, %v1845
    %v1847 = vpop.f32.mrb[0].mxu0
    %1848 = vdwg.mxu0
    %v1849 = vadd.f32 %v1674, %v1841
    %v1850 = vadd.f32 %v1675, %v1846
    %s1851 = scalar_lea.vmem [#allocation6], 640
    %v1852 = vld [vmem:[%s1851] sm:$0xff]
    %v1853 = vld [vmem:[%s1851 + $0x8] sm:$0xff]
    %v1854 = vld [vmem:[%s1851 + $0x10] sm:$0xff]
    %v1855 = vld [vmem:[%s1851 + $0x18] sm:$0xff]
    %v1856 = vld [vmem:[%s1851 + $0x20] sm:$0xff]
    %v1857 = vld [vmem:[%s1851 + $0x28] sm:$0xff]
    %v1858 = vld [vmem:[%s1851 + $0x30] sm:$0xff]
    %v1859 = vld [vmem:[%s1851 + $0x38] sm:$0xff]
    %v1860 = vld [vmem:[%s1851 + $0x40] sm:$0xff]
    %v1861 = vld [vmem:[%s1851 + $0x48] sm:$0xff]
    %v1862 = vld [vmem:[%s1851 + $0x50] sm:$0xff]
    %v1863 = vld [vmem:[%s1851 + $0x58] sm:$0xff]
    %v1864 = vld [vmem:[%s1851 + $0x60] sm:$0xff]
    %v1865 = vld [vmem:[%s1851 + $0x68] sm:$0xff]
    %v1866 = vld [vmem:[%s1851 + $0x70] sm:$0xff]
    %v1867 = vld [vmem:[%s1851 + $0x78] sm:$0xff]
    %v1868 = vld [vmem:[#allocation2 + $0xf] sm:$0xff]
    %v1869 = vld [vmem:[#allocation2 + $0x17] sm:$0xff]
    %1870 = vmatprep.subr.mxu0 0.0
    %1871 = vmatpush1.msra.mxu0 %v1852
    %1872 = vmatprep.subr.mxu0 0.0
    %1873 = vmatpush1.msra.mxu0 %v1853
    %1874 = vmatprep.subr.mxu0 0.0
    %1875 = vmatpush1.msra.mxu0 %v1854
    %1876 = vmatprep.subr.mxu0 0.0
    %1877 = vmatpush1.msra.mxu0 %v1855
    %1878 = vmatprep.subr.mxu0 0.0
    %1879 = vmatpush1.msra.mxu0 %v1856
    %1880 = vmatprep.subr.mxu0 0.0
    %1881 = vmatpush1.msra.mxu0 %v1857
    %1882 = vmatprep.subr.mxu0 0.0
    %1883 = vmatpush1.msra.mxu0 %v1858
    %1884 = vmatprep.subr.mxu0 0.0
    %1885 = vmatpush1.msra.mxu0 %v1859
    %1886 = vmatprep.subr.mxu0 0.0
    %1887 = vmatpush1.msra.mxu0 %v1860
    %1888 = vmatprep.subr.mxu0 0.0
    %1889 = vmatpush1.msra.mxu0 %v1861
    %1890 = vmatprep.subr.mxu0 0.0
    %1891 = vmatpush1.msra.mxu0 %v1862
    %1892 = vmatprep.subr.mxu0 0.0
    %1893 = vmatpush1.msra.mxu0 %v1863
    %1894 = vmatprep.subr.mxu0 0.0
    %1895 = vmatpush1.msra.mxu0 %v1864
    %1896 = vmatprep.subr.mxu0 0.0
    %1897 = vmatpush1.msra.mxu0 %v1865
    %1898 = vmatprep.subr.mxu0 0.0
    %1899 = vmatpush1.msra.mxu0 %v1866
    %1900 = vmatprep.subr.mxu0 0.0
    %1901 = vmatpush1.msra.mxu0 %v1867
    %1902 = vmatprep.subr.mxu0 0.0
    %1903 = vmatpush1.msra.mxu0 0.0
    %1904 = vmatprep.subr.mxu0 0.0
    %1905 = vmatpush1.msra.mxu0 0.0
    %1906 = vmatprep.subr.mxu0 0.0
    %1907 = vmatpush1.msra.mxu0 0.0
    %1908 = vmatprep.subr.mxu0 0.0
    %1909 = vmatpush1.msra.mxu0 0.0
    %1910 = vmatprep.subr.mxu0 0.0
    %1911 = vmatpush1.msra.mxu0 0.0
    %1912 = vmatprep.subr.mxu0 0.0
    %1913 = vmatpush1.msra.mxu0 0.0
    %1914 = vmatprep.subr.mxu0 0.0
    %1915 = vmatpush1.msra.mxu0 0.0
    %1916 = vmatprep.subr.mxu0 0.0
    %1917 = vmatpush1.msra.mxu0 0.0
    %1918 = vmatprep.subr.mxu0 0.0
    %1919 = vmatpush1.msra.mxu0 0.0
    %1920 = vmatprep.subr.mxu0 0.0
    %1921 = vmatpush1.msra.mxu0 0.0
    %1922 = vmatprep.subr.mxu0 0.0
    %1923 = vmatpush1.msra.mxu0 0.0
    %1924 = vmatprep.subr.mxu0 0.0
    %1925 = vmatpush1.msra.mxu0 0.0
    %1926 = vmatprep.subr.mxu0 0.0
    %1927 = vmatpush1.msra.mxu0 0.0
    %1928 = vmatprep.subr.mxu0 0.0
    %1929 = vmatpush1.msra.mxu0 0.0
    %1930 = vmatprep.subr.mxu0 0.0
    %1931 = vmatpush1.msra.mxu0 0.0
    %1932 = vmatprep.subr.mxu0 0.0
    %1933 = vmatpush1.msra.mxu0 0.0
    %1934 = vmatprep.mubr.f32.mxu0 0.0
    %1935 = vmatmul.mubr.f32.gmra.mrb[0].mxu0 %v1868
    %v1936 = vpop.f32.mrb[0].mxu0
    %v1937 = vadd.f32 0.0, %v1936
    %v1938 = vpop.f32.mrb[0].mxu0
    %1939 = vmatprep.mubr.f32.mxu0 0.0
    %1940 = vmatmul.mubr.f32.gmra.mrb[0].mxu0 %v1869
    %v1941 = vpop.f32.mrb[0].mxu0
    %v1942 = vadd.f32 0.0, %v1941
    %v1943 = vpop.f32.mrb[0].mxu0
    %1944 = vdwg.mxu0
    %v1945 = vadd.f32 %v1770, %v1937
    %v1946 = vadd.f32 %v1771, %v1942
    %v1947 = vld [vmem:[%s974 + $0xf] sm:$0xff]
    %v1948 = vld [vmem:[%s974 + $0x17] sm:$0xff]
    %1949 = vmatprep.subr.mxu0 0.0
    %1950 = vmatpush1.msra.mxu0 %v1852
    %1951 = vmatprep.subr.mxu0 0.0
    %1952 = vmatpush1.msra.mxu0 %v1853
    %1953 = vmatprep.subr.mxu0 0.0
    %1954 = vmatpush1.msra.mxu0 %v1854
    %1955 = vmatprep.subr.mxu0 0.0
    %1956 = vmatpush1.msra.mxu0 %v1855
    %1957 = vmatprep.subr.mxu0 0.0
    %1958 = vmatpush1.msra.mxu0 %v1856
    %1959 = vmatprep.subr.mxu0 0.0
    %1960 = vmatpush1.msra.mxu0 %v1857
    %1961 = vmatprep.subr.mxu0 0.0
    %1962 = vmatpush1.msra.mxu0 %v1858
    %1963 = vmatprep.subr.mxu0 0.0
    %1964 = vmatpush1.msra.mxu0 %v1859
    %1965 = vmatprep.subr.mxu0 0.0
    %1966 = vmatpush1.msra.mxu0 %v1860
    %1967 = vmatprep.subr.mxu0 0.0
    %1968 = vmatpush1.msra.mxu0 %v1861
    %1969 = vmatprep.subr.mxu0 0.0
    %1970 = vmatpush1.msra.mxu0 %v1862
    %1971 = vmatprep.subr.mxu0 0.0
    %1972 = vmatpush1.msra.mxu0 %v1863
    %1973 = vmatprep.subr.mxu0 0.0
    %1974 = vmatpush1.msra.mxu0 %v1864
    %1975 = vmatprep.subr.mxu0 0.0
    %1976 = vmatpush1.msra.mxu0 %v1865
    %1977 = vmatprep.subr.mxu0 0.0
    %1978 = vmatpush1.msra.mxu0 %v1866
    %1979 = vmatprep.subr.mxu0 0.0
    %1980 = vmatpush1.msra.mxu0 %v1867
    %1981 = vmatprep.subr.mxu0 0.0
    %1982 = vmatpush1.msra.mxu0 0.0
    %1983 = vmatprep.subr.mxu0 0.0
    %1984 = vmatpush1.msra.mxu0 0.0
    %1985 = vmatprep.subr.mxu0 0.0
    %1986 = vmatpush1.msra.mxu0 0.0
    %1987 = vmatprep.subr.mxu0 0.0
    %1988 = vmatpush1.msra.mxu0 0.0
    %1989 = vmatprep.subr.mxu0 0.0
    %1990 = vmatpush1.msra.mxu0 0.0
    %1991 = vmatprep.subr.mxu0 0.0
    %1992 = vmatpush1.msra.mxu0 0.0
    %1993 = vmatprep.subr.mxu0 0.0
    %1994 = vmatpush1.msra.mxu0 0.0
    %1995 = vmatprep.subr.mxu0 0.0
    %1996 = vmatpush1.msra.mxu0 0.0
    %1997 = vmatprep.subr.mxu0 0.0
    %1998 = vmatpush1.msra.mxu0 0.0
    %1999 = vmatprep.subr.mxu0 0.0
    %2000 = vmatpush1.msra.mxu0 0.0
    %2001 = vmatprep.subr.mxu0 0.0
    %2002 = vmatpush1.msra.mxu0 0.0
    %2003 = vmatprep.subr.mxu0 0.0
    %2004 = vmatpush1.msra.mxu0 0.0
    %2005 = vmatprep.subr.mxu0 0.0
    %2006 = vmatpush1.msra.mxu0 0.0
    %2007 = vmatprep.subr.mxu0 0.0
    %2008 = vmatpush1.msra.mxu0 0.0
    %2009 = vmatprep.subr.mxu0 0.0
    %2010 = vmatpush1.msra.mxu0 0.0
    %2011 = vmatprep.subr.mxu0 0.0
    %2012 = vmatpush1.msra.mxu0 0.0
    %2013 = vmatprep.mubr.f32.mxu0 0.0
    %2014 = vmatmul.mubr.f32.gmra.mrb[0].mxu0 %v1947
    %v2015 = vpop.f32.mrb[0].mxu0
    %v2016 = vadd.f32 0.0, %v2015
    %v2017 = vpop.f32.mrb[0].mxu0
    %2018 = vmatprep.mubr.f32.mxu0 0.0
    %2019 = vmatmul.mubr.f32.gmra.mrb[0].mxu0 %v1948
    %v2020 = vpop.f32.mrb[0].mxu0
    %v2021 = vadd.f32 0.0, %v2020
    %v2022 = vpop.f32.mrb[0].mxu0
    %2023 = vdwg.mxu0
    %v2024 = vadd.f32 %v1849, %v2016
    %v2025 = vadd.f32 %v1850, %v2021
    %s2026 = scalar_lea.vmem [#allocation6], 768
    %v2027 = vld [vmem:[%s2026] sm:$0xff]
    %v2028 = vld [vmem:[%s2026 + $0x8] sm:$0xff]
    %v2029 = vld [vmem:[%s2026 + $0x10] sm:$0xff]
    %v2030 = vld [vmem:[%s2026 + $0x18] sm:$0xff]
    %v2031 = vld [vmem:[%s2026 + $0x20] sm:$0xff]
    %v2032 = vld [vmem:[%s2026 + $0x28] sm:$0xff]
    %v2033 = vld [vmem:[%s2026 + $0x30] sm:$0xff]
    %v2034 = vld [vmem:[%s2026 + $0x38] sm:$0xff]
    %v2035 = vld [vmem:[%s2026 + $0x40] sm:$0xff]
    %v2036 = vld [vmem:[%s2026 + $0x48] sm:$0xff]
    %v2037 = vld [vmem:[%s2026 + $0x50] sm:$0xff]
    %v2038 = vld [vmem:[%s2026 + $0x58] sm:$0xff]
    %v2039 = vld [vmem:[%s2026 + $0x60] sm:$0xff]
    %v2040 = vld [vmem:[%s2026 + $0x68] sm:$0xff]
    %v2041 = vld [vmem:[%s2026 + $0x70] sm:$0xff]
    %v2042 = vld [vmem:[%s2026 + $0x78] sm:$0xff]
    %v2043 = vld [vmem:[#allocation2 + $0x12] sm:$0xff]
    %v2044 = vld [vmem:[#allocation2 + $0x1a] sm:$0xff]
    %2045 = vmatprep.subr.mxu0 0.0
    %2046 = vmatpush1.msra.mxu0 %v2027
    %2047 = vmatprep.subr.mxu0 0.0
    %2048 = vmatpush1.msra.mxu0 %v2028
    %2049 = vmatprep.subr.mxu0 0.0
    %2050 = vmatpush1.msra.mxu0 %v2029
    %2051 = vmatprep.subr.mxu0 0.0
    %2052 = vmatpush1.msra.mxu0 %v2030
    %2053 = vmatprep.subr.mxu0 0.0
    %2054 = vmatpush1.msra.mxu0 %v2031
    %2055 = vmatprep.subr.mxu0 0.0
    %2056 = vmatpush1.msra.mxu0 %v2032
    %2057 = vmatprep.subr.mxu0 0.0
    %2058 = vmatpush1.msra.mxu0 %v2033
    %2059 = vmatprep.subr.mxu0 0.0
    %2060 = vmatpush1.msra.mxu0 %v2034
    %2061 = vmatprep.subr.mxu0 0.0
    %2062 = vmatpush1.msra.mxu0 %v2035
    %2063 = vmatprep.subr.mxu0 0.0
    %2064 = vmatpush1.msra.mxu0 %v2036
    %2065 = vmatprep.subr.mxu0 0.0
    %2066 = vmatpush1.msra.mxu0 %v2037
    %2067 = vmatprep.subr.mxu0 0.0
    %2068 = vmatpush1.msra.mxu0 %v2038
    %2069 = vmatprep.subr.mxu0 0.0
    %2070 = vmatpush1.msra.mxu0 %v2039
    %2071 = vmatprep.subr.mxu0 0.0
    %2072 = vmatpush1.msra.mxu0 %v2040
    %2073 = vmatprep.subr.mxu0 0.0
    %2074 = vmatpush1.msra.mxu0 %v2041
    %2075 = vmatprep.subr.mxu0 0.0
    %2076 = vmatpush1.msra.mxu0 %v2042
    %2077 = vmatprep.subr.mxu0 0.0
    %2078 = vmatpush1.msra.mxu0 0.0
    %2079 = vmatprep.subr.mxu0 0.0
    %2080 = vmatpush1.msra.mxu0 0.0
    %2081 = vmatprep.subr.mxu0 0.0
    %2082 = vmatpush1.msra.mxu0 0.0
    %2083 = vmatprep.subr.mxu0 0.0
    %2084 = vmatpush1.msra.mxu0 0.0
    %2085 = vmatprep.subr.mxu0 0.0
    %2086 = vmatpush1.msra.mxu0 0.0
    %2087 = vmatprep.subr.mxu0 0.0
    %2088 = vmatpush1.msra.mxu0 0.0
    %2089 = vmatprep.subr.mxu0 0.0
    %2090 = vmatpush1.msra.mxu0 0.0
    %2091 = vmatprep.subr.mxu0 0.0
    %2092 = vmatpush1.msra.mxu0 0.0
    %2093 = vmatprep.subr.mxu0 0.0
    %2094 = vmatpush1.msra.mxu0 0.0
    %2095 = vmatprep.subr.mxu0 0.0
    %2096 = vmatpush1.msra.mxu0 0.0
    %2097 = vmatprep.subr.mxu0 0.0
    %2098 = vmatpush1.msra.mxu0 0.0
    %2099 = vmatprep.subr.mxu0 0.0
    %2100 = vmatpush1.msra.mxu0 0.0
    %2101 = vmatprep.subr.mxu0 0.0
    %2102 = vmatpush1.msra.mxu0 0.0
    %2103 = vmatprep.subr.mxu0 0.0
    %2104 = vmatpush1.msra.mxu0 0.0
    %2105 = vmatprep.subr.mxu0 0.0
    %2106 = vmatpush1.msra.mxu0 0.0
    %2107 = vmatprep.subr.mxu0 0.0
    %2108 = vmatpush1.msra.mxu0 0.0
    %2109 = vmatprep.mubr.f32.mxu0 0.0
    %2110 = vmatmul.mubr.f32.gmra.mrb[0].mxu0 %v2043
    %v2111 = vpop.f32.mrb[0].mxu0
    %v2112 = vadd.f32 0.0, %v2111
    %v2113 = vpop.f32.mrb[0].mxu0
    %2114 = vmatprep.mubr.f32.mxu0 0.0
    %2115 = vmatmul.mubr.f32.gmra.mrb[0].mxu0 %v2044
    %v2116 = vpop.f32.mrb[0].mxu0
    %v2117 = vadd.f32 0.0, %v2116
    %v2118 = vpop.f32.mrb[0].mxu0
    %2119 = vdwg.mxu0
    %v2120 = vadd.f32 %v1945, %v2112
    %v2121 = vadd.f32 %v1946, %v2117
    %v2122 = vld [vmem:[%s974 + $0x12] sm:$0xff]
    %v2123 = vld [vmem:[%s974 + $0x1a] sm:$0xff]
    %2124 = vmatprep.subr.mxu0 0.0
    %2125 = vmatpush1.msra.mxu0 %v2027
    %2126 = vmatprep.subr.mxu0 0.0
    %2127 = vmatpush1.msra.mxu0 %v2028
    %2128 = vmatprep.subr.mxu0 0.0
    %2129 = vmatpush1.msra.mxu0 %v2029
    %2130 = vmatprep.subr.mxu0 0.0
    %2131 = vmatpush1.msra.mxu0 %v2030
    %2132 = vmatprep.subr.mxu0 0.0
    %2133 = vmatpush1.msra.mxu0 %v2031
    %2134 = vmatprep.subr.mxu0 0.0
    %2135 = vmatpush1.msra.mxu0 %v2032
    %2136 = vmatprep.subr.mxu0 0.0
    %2137 = vmatpush1.msra.mxu0 %v2033
    %2138 = vmatprep.subr.mxu0 0.0
    %2139 = vmatpush1.msra.mxu0 %v2034
    %2140 = vmatprep.subr.mxu0 0.0
    %2141 = vmatpush1.msra.mxu0 %v2035
    %2142 = vmatprep.subr.mxu0 0.0
    %2143 = vmatpush1.msra.mxu0 %v2036
    %2144 = vmatprep.subr.mxu0 0.0
    %2145 = vmatpush1.msra.mxu0 %v2037
    %2146 = vmatprep.subr.mxu0 0.0
    %2147 = vmatpush1.msra.mxu0 %v2038
    %2148 = vmatprep.subr.mxu0 0.0
    %2149 = vmatpush1.msra.mxu0 %v2039
    %2150 = vmatprep.subr.mxu0 0.0
    %2151 = vmatpush1.msra.mxu0 %v2040
    %2152 = vmatprep.subr.mxu0 0.0
    %2153 = vmatpush1.msra.mxu0 %v2041
    %2154 = vmatprep.subr.mxu0 0.0
    %2155 = vmatpush1.msra.mxu0 %v2042
    %2156 = vmatprep.subr.mxu0 0.0
    %2157 = vmatpush1.msra.mxu0 0.0
    %2158 = vmatprep.subr.mxu0 0.0
    %2159 = vmatpush1.msra.mxu0 0.0
    %2160 = vmatprep.subr.mxu0 0.0
    %2161 = vmatpush1.msra.mxu0 0.0
    %2162 = vmatprep.subr.mxu0 0.0
    %2163 = vmatpush1.msra.mxu0 0.0
    %2164 = vmatprep.subr.mxu0 0.0
    %2165 = vmatpush1.msra.mxu0 0.0
    %2166 = vmatprep.subr.mxu0 0.0
    %2167 = vmatpush1.msra.mxu0 0.0
    %2168 = vmatprep.subr.mxu0 0.0
    %2169 = vmatpush1.msra.mxu0 0.0
    %2170 = vmatprep.subr.mxu0 0.0
    %2171 = vmatpush1.msra.mxu0 0.0
    %2172 = vmatprep.subr.mxu0 0.0
    %2173 = vmatpush1.msra.mxu0 0.0
    %2174 = vmatprep.subr.mxu0 0.0
    %2175 = vmatpush1.msra.mxu0 0.0
    %2176 = vmatprep.subr.mxu0 0.0
    %2177 = vmatpush1.msra.mxu0 0.0
    %2178 = vmatprep.subr.mxu0 0.0
    %2179 = vmatpush1.msra.mxu0 0.0
    %2180 = vmatprep.subr.mxu0 0.0
    %2181 = vmatpush1.msra.mxu0 0.0
    %2182 = vmatprep.subr.mxu0 0.0
    %2183 = vmatpush1.msra.mxu0 0.0
    %2184 = vmatprep.subr.mxu0 0.0
    %2185 = vmatpush1.msra.mxu0 0.0
    %2186 = vmatprep.subr.mxu0 0.0
    %2187 = vmatpush1.msra.mxu0 0.0
    %2188 = vmatprep.mubr.f32.mxu0 0.0
    %2189 = vmatmul.mubr.f32.gmra.mrb[0].mxu0 %v2122
    %v2190 = vpop.f32.mrb[0].mxu0
    %v2191 = vadd.f32 0.0, %v2190
    %v2192 = vpop.f32.mrb[0].mxu0
    %2193 = vmatprep.mubr.f32.mxu0 0.0
    %2194 = vmatmul.mubr.f32.gmra.mrb[0].mxu0 %v2123
    %v2195 = vpop.f32.mrb[0].mxu0
    %v2196 = vadd.f32 0.0, %v2195
    %v2197 = vpop.f32.mrb[0].mxu0
    %2198 = vdwg.mxu0
    %v2199 = vadd.f32 %v2024, %v2191
    %v2200 = vadd.f32 %v2025, %v2196
    %v2201 = vld [vmem:[#allocation8] sm:$0xff]
    %v2202 = vld [vmem:[#allocation8 + $0x8] sm:$0xff]
    %v2203 = vld [vmem:[#allocation8 + $0x10] sm:$0xff]
    %v2204 = vld [vmem:[#allocation8 + $0x18] sm:$0xff]
    %v2205 = vld [vmem:[#allocation8 + $0x20] sm:$0xff]
    %v2206 = vld [vmem:[#allocation8 + $0x28] sm:$0xff]
    %v2207 = vld [vmem:[#allocation8 + $0x30] sm:$0xff]
    %v2208 = vld [vmem:[#allocation8 + $0x38] sm:$0xff]
    %v2209 = vld [vmem:[#allocation8 + $0x40] sm:$0xff]
    %v2210 = vld [vmem:[#allocation8 + $0x48] sm:$0xff]
    %v2211 = vld [vmem:[#allocation8 + $0x50] sm:$0xff]
    %v2212 = vld [vmem:[#allocation8 + $0x58] sm:$0xff]
    %v2213 = vld [vmem:[#allocation8 + $0x60] sm:$0xff]
    %v2214 = vld [vmem:[#allocation8 + $0x68] sm:$0xff]
    %v2215 = vld [vmem:[#allocation8 + $0x70] sm:$0xff]
    %v2216 = vld [vmem:[#allocation8 + $0x78] sm:$0xff]
    %2217 = vmatprep.subr.mxu0 0.0
    %2218 = vmatpush1.msra.mxu0 %v2201
    %2219 = vmatprep.subr.mxu0 0.0
    %2220 = vmatpush1.msra.mxu0 %v2202
    %2221 = vmatprep.subr.mxu0 0.0
    %2222 = vmatpush1.msra.mxu0 %v2203
    %2223 = vmatprep.subr.mxu0 0.0
    %2224 = vmatpush1.msra.mxu0 %v2204
    %2225 = vmatprep.subr.mxu0 0.0
    %2226 = vmatpush1.msra.mxu0 %v2205
    %2227 = vmatprep.subr.mxu0 0.0
    %2228 = vmatpush1.msra.mxu0 %v2206
    %2229 = vmatprep.subr.mxu0 0.0
    %2230 = vmatpush1.msra.mxu0 %v2207
    %2231 = vmatprep.subr.mxu0 0.0
    %2232 = vmatpush1.msra.mxu0 %v2208
    %2233 = vmatprep.subr.mxu0 0.0
    %2234 = vmatpush1.msra.mxu0 %v2209
    %2235 = vmatprep.subr.mxu0 0.0
    %2236 = vmatpush1.msra.mxu0 %v2210
    %2237 = vmatprep.subr.mxu0 0.0
    %2238 = vmatpush1.msra.mxu0 %v2211
    %2239 = vmatprep.subr.mxu0 0.0
    %2240 = vmatpush1.msra.mxu0 %v2212
    %2241 = vmatprep.subr.mxu0 0.0
    %2242 = vmatpush1.msra.mxu0 %v2213
    %2243 = vmatprep.subr.mxu0 0.0
    %2244 = vmatpush1.msra.mxu0 %v2214
    %2245 = vmatprep.subr.mxu0 0.0
    %2246 = vmatpush1.msra.mxu0 %v2215
    %2247 = vmatprep.subr.mxu0 0.0
    %2248 = vmatpush1.msra.mxu0 %v2216
    %2249 = vmatprep.subr.mxu0 0.0
    %2250 = vmatpush1.msra.mxu0 0.0
    %2251 = vmatprep.subr.mxu0 0.0
    %2252 = vmatpush1.msra.mxu0 0.0
    %2253 = vmatprep.subr.mxu0 0.0
    %2254 = vmatpush1.msra.mxu0 0.0
    %2255 = vmatprep.subr.mxu0 0.0
    %2256 = vmatpush1.msra.mxu0 0.0
    %2257 = vmatprep.subr.mxu0 0.0
    %2258 = vmatpush1.msra.mxu0 0.0
    %2259 = vmatprep.subr.mxu0 0.0
    %2260 = vmatpush1.msra.mxu0 0.0
    %2261 = vmatprep.subr.mxu0 0.0
    %2262 = vmatpush1.msra.mxu0 0.0
    %2263 = vmatprep.subr.mxu0 0.0
    %2264 = vmatpush1.msra.mxu0 0.0
    %2265 = vmatprep.subr.mxu0 0.0
    %2266 = vmatpush1.msra.mxu0 0.0
    %2267 = vmatprep.subr.mxu0 0.0
    %2268 = vmatpush1.msra.mxu0 0.0
    %2269 = vmatprep.subr.mxu0 0.0
    %2270 = vmatpush1.msra.mxu0 0.0
    %2271 = vmatprep.subr.mxu0 0.0
    %2272 = vmatpush1.msra.mxu0 0.0
    %2273 = vmatprep.subr.mxu0 0.0
    %2274 = vmatpush1.msra.mxu0 0.0
    %2275 = vmatprep.subr.mxu0 0.0
    %2276 = vmatpush1.msra.mxu0 0.0
    %2277 = vmatprep.subr.mxu0 0.0
    %2278 = vmatpush1.msra.mxu0 0.0
    %2279 = vmatprep.subr.mxu0 0.0
    %2280 = vmatpush1.msra.mxu0 0.0
    %2281 = vmatprep.mubr.f32.mxu0 0.0
    %2282 = vmatmul.mubr.f32.gmra.mrb[0].mxu0 %v2120
    %v2283 = vpop.f32.mrb[0].mxu0
    %v2284 = vadd.f32 %v95, %v2283
    %v2285 = vpop.f32.mrb[0].mxu0
    %2286 = vmatprep.mubr.f32.mxu0 0.0
    %2287 = vmatmul.mubr.f32.gmra.mrb[0].mxu0 %v2121
    %v2288 = vpop.f32.mrb[0].mxu0
    %v2289 = vadd.f32 %v95, %v2288
    %v2290 = vpop.f32.mrb[0].mxu0
    %2291 = vmatprep.mubr.f32.mxu0 0.0
    %2292 = vmatmul.mubr.f32.gmra.mrb[0].mxu0 %v2199
    %v2293 = vpop.f32.mrb[0].mxu0
    %v2294 = vadd.f32 %v95, %v2293
    %v2295 = vpop.f32.mrb[0].mxu0
    %2296 = vmatprep.mubr.f32.mxu0 0.0
    %2297 = vmatmul.mubr.f32.gmra.mrb[0].mxu0 %v2200
    %v2298 = vpop.f32.mrb[0].mxu0
    %v2299 = vadd.f32 %v95, %v2298
    %v2300 = vpop.f32.mrb[0].mxu0
    %2301 = vdwg.mxu0
    %v2302 = vld [vmem:[%s0 + $0x2] sm:$0xff]
    %v2303 = vld [vmem:[%s0 + $0xa] sm:$0xff]
    %v2304 = vmul.f32 %v2302, %v2284
    %v2305 = vmul.f32 %v2303, %v2289
    %2306 = vst [vmem:[#allocation9] sm:$0xff] %v2304
    %2307 = vst [vmem:[#allocation9 + $0x8] sm:$0xff] %v2305
    %v2308 = vld [vmem:[%s192 + $0x2] sm:$0xff]
    %v2309 = vld [vmem:[%s192 + $0xa] sm:$0xff]
    %v2310 = vmul.f32 %v2308, %v2294
    %v2311 = vmul.f32 %v2309, %v2299
    %s2312 = scalar_lea.vmem [#allocation9], 16
    %2313 = vst [vmem:[%s2312] sm:$0xff] %v2310
    %2314 = vst [vmem:[%s2312 + $0x8] sm:$0xff] %v2311
    // Predicated region
    $region42: #{tpu_custom_call.1} parent=1 // pred_check
      _
    $region43: #{tpu_custom_call.1} parent=1 // pred_check_branch
      %2316 = sbr.rel (0) target = $region45
    $region44: #{tpu_custom_call.1} parent=1 // pred_region
      %s2318 = ssub.s32 512, 512
      %2319 = vsyncadd [#allocation5], %s2318
      %s2320 = sshll.u32 [#allocation9], 4
      %s2321 = int_to_ptr.vmem [resolvable:$true] %s2320
      %2326 = dma.vmem_to_hbm [thread:$0]  %s2321, 512, %s7, [#allocation5], 128, 128, 8
    $region45: #{tpu_custom_call.1} parent=1 // pred_fallthru
      _
    // Predicated region
    $region46: #{tpu_custom_call.1} parent=1 // pred_check
      _
    $region47: #{tpu_custom_call.1} parent=1 // pred_check_branch
      %2328 = sbr.rel (0) target = $region49
    $region48: #{tpu_custom_call.1} parent=1 // pred_region
      %2329 = dma.done [#allocation5], 512
    $region49: #{tpu_custom_call.1} parent=1 // pred_fallthru
      _
    %2330 = vsyncpa [#allocation4], 1
    %2331 = vsyncpa [#allocation7], 1
    %2332 = vsyncpa [#allocation5], 1

</llo_original>
